<compile_context>
chip_gen: v6e
topology: v6e:2x2x1
jax: 0.10.0
libtpu: 0.0.40
codegen_flags: <defaults>
</compile_context>

<pallas_src>
import jax
import jax.numpy as jnp
from jax.experimental import pallas as pl
from jax.experimental.pallas import tpu as pltpu


# ------------------------------------------------------------------ kernel ---
def _tabmlp_kernel(idx_ref, xc_ref,
                   w1c_ref, w1n_ref, b1_ref,
                   w2_ref, b2_ref, wp_ref, bp_ref,
                   o_ref):
    tb = idx_ref.shape[0]
    n_cat = idx_ref.shape[1]
    V = w1c_ref.shape[0]          # total stacked vocab rows (sum of vocab_i + 1)

    # Multi-hot row selector for the (embedding @ w1) folded weight.  The
    # indices already carry per-feature row offsets into the stacked table, so
    # the per-feature one-hots live in disjoint column ranges and can be summed.
    idx = idx_ref[...]                                          # (tb, n_cat) i32
    col = jax.lax.broadcasted_iota(jnp.int32, (tb, V), 1)       # (tb, V)
    onehot = jnp.zeros((tb, V), jnp.float32)
    for j in range(n_cat):                                      # static, tiny
        onehot = onehot + (col == idx[:, j:j + 1]).astype(jnp.float32)

    # dense_layer 0: (embedding + BN)-folded Linear + ReLU, f32 accumulation.
    h = jnp.dot(onehot.astype(w1c_ref.dtype), w1c_ref[...],
                preferred_element_type=jnp.float32)
    h = h + jnp.dot(xc_ref[...], w1n_ref[...],
                    preferred_element_type=jnp.float32)
    h = jnp.maximum(h + b1_ref[...], 0.0)

    # dense_layer 1: Linear + ReLU.
    h = jnp.dot(h.astype(w2_ref.dtype), w2_ref[...],
                preferred_element_type=jnp.float32) + b2_ref[...]
    h = jnp.maximum(h, 0.0)

    # pred_layer: Linear.
    o = jnp.dot(h.astype(wp_ref.dtype), wp_ref[...],
                preferred_element_type=jnp.float32) + bp_ref[...]
    o_ref[...] = o.astype(o_ref.dtype)


def tabmlp_pallas(idx, x_cont, w1c, w1n, b1, w2, b2, wp, bp, *, tb):
    B, n_cat = idx.shape
    n_cont = x_cont.shape[1]
    V, H1 = w1c.shape
    H2 = w2.shape[1]
    P = wp.shape[1]
    assert B % tb == 0 and tb % 8 == 0

    rep = lambda i: (0, 0)  # replicated weights / biases (VMEM-resident)

    return pl.pallas_call(
        _tabmlp_kernel,
        out_shape=jax.ShapeDtypeStruct((B, P), jnp.float32),
        grid_spec=pltpu.PrefetchScalarGridSpec(
            num_scalar_prefetch=0,
            grid=(B // tb,),
            in_specs=[
                pl.BlockSpec((tb, n_cat), lambda i: (i, 0)),   # cat indices (i32)
                pl.BlockSpec((tb, n_cont), lambda i: (i, 0)),  # cont cols (bf16)
                pl.BlockSpec((V, H1), rep),                    # folded emb @ w1 (bf16)
                pl.BlockSpec((n_cont, H1), rep),               # BN-folded w1_cont (bf16)
                pl.BlockSpec((1, H1), rep),                    # folded b1 (f32)
                pl.BlockSpec((H1, H2), rep),                   # w2 (bf16)
                pl.BlockSpec((1, H2), rep),                    # b2 (f32)
                pl.BlockSpec((H2, P), rep),                    # wp (bf16)
                pl.BlockSpec((1, P), rep),                     # bp (f32)
            ],
            out_specs=pl.BlockSpec((tb, P), lambda i: (i, 0)),
        ),
        compiler_params=pltpu.CompilerParams(
            dimension_semantics=("parallel",)),
    )(idx, x_cont, w1c, w1n, b1, w2, b2, wp, bp)


# --------------------------------------------------------------- full model ---
def tabmlp_forward(X, params, config, *, tb=256):
    """Trace-time folding (embeddings + eval BN -> first Linear) + Pallas MLP."""
    column_idx = config["column_idx"]
    embed_input = config["embed_input"]
    continuous_cols = config["continuous_cols"]

    B = X.shape[0]
    emb_dims = [d for _, _, d in embed_input]
    n_emb = sum(emb_dims)
    n_cont = len(continuous_cols)

    # --- fold the embedding tables into the cat rows of w1 (block-stacked) ---
    w1 = params["w1"].astype(jnp.float32)        # (n_emb + n_cont, H1)
    b1 = params["b1"].astype(jnp.float32)        # (1, H1)

    w1c_blocks = []
    row_offsets = []
    d0, off = 0, 0
    for col, vocab, dim in embed_input:
        tbl = params["emb"][col].astype(jnp.float32)        # (vocab+1, dim), row 0 == 0
        w1c_blocks.append(tbl @ w1[d0:d0 + dim, :])          # (vocab+1, H1)
        row_offsets.append(off)
        d0 += dim
        off += vocab + 1
    w1c = jnp.concatenate(w1c_blocks, axis=0)                # (V_total, H1)

    # --- fold eval-mode BatchNorm1d(cont) into the cont rows of w1 and b1 ---
    bn = params["cont_norm"]
    inv_std = 1.0 / jnp.sqrt(bn["var"] + 1e-5)               # PyTorch eps default
    cont_scale = bn["gamma"] * inv_std
    cont_shift = bn["beta"] - bn["mean"] * cont_scale
    w1_cont = w1[n_emb:, :]                                  # (n_cont, H1)
    w1n = cont_scale[:, None] * w1_cont
    b1_eff = b1 + cont_shift[None, :] @ w1_cont              # (1, H1)

    # --- tiny kernel input streams (no x_emb / concat x ever hits HBM) ---
    idx = jnp.stack(
        [X[:, column_idx[col]].astype(jnp.int32) + row_offsets[j]
         for j, (col, _, _) in enumerate(embed_input)], axis=1)       # (B, n_cat) i32
    cont_idx = jnp.array([column_idx[c] for c in continuous_cols], dtype=jnp.int32)
    x_cont = X[:, cont_idx].astype(jnp.bfloat16)                       # (B, n_cont)

    # bf16 weight stream, f32 biases.
    w1c = w1c.astype(jnp.bfloat16)
    w1n = w1n.astype(jnp.bfloat16)
    w2 = params["w2"].astype(jnp.bfloat16)
    wp = params["wp"].astype(jnp.bfloat16)
    b2 = params["b2"].astype(jnp.float32)
    bp = params["bp"].astype(jnp.float32)

    # --- batch tiling: multiple of 8 rows; grid >= 2 whenever B allows (v7x) ---
    tb_eff = max(8, min(tb, B))
    tb_eff -= tb_eff % 8
    pad = (-B) % tb_eff
    if pad:
        # padded rows index 0 -> zero embedding rows; outputs sliced off below
        idx = jnp.pad(idx, ((0, pad), (0, 0)))
        x_cont = jnp.pad(x_cont, ((0, pad), (0, 0)))

    out = tabmlp_pallas(idx, x_cont, w1c, w1n, b1_eff, w2, b2, wp, bp, tb=tb_eff)
    return out[:B]


# ------------------------------------------------------------------ params ---
def init_params(key, config):
    embed_input = config["embed_input"]
    continuous_cols = config["continuous_cols"]
    mlp_hidden = config["mlp_hidden_dims"]
    pred_dim = config["pred_dim"]

    emb_out_dim = sum(d for _, _, d in embed_input)
    d_in = emb_out_dim + len(continuous_cols)
    dims = [d_in] + mlp_hidden

    keys = jax.random.split(key, 16)
    params = {"emb": {}}
    for i, (col, vocab, dim) in enumerate(embed_input):
        tbl = 0.1 * jax.random.normal(keys[i], (vocab + 1, dim), jnp.float32)
        tbl = tbl.at[0].set(0.0)                      # padding_idx=0
        params["emb"][col] = tbl

    n_cont = len(continuous_cols)
    params["cont_norm"] = {
        "gamma": jnp.ones((n_cont,), jnp.float32),
        "beta": jnp.zeros((n_cont,), jnp.float32),
        "mean": jnp.zeros((n_cont,), jnp.float32),
        "var": jnp.ones((n_cont,), jnp.float32),
    }

    params["w1"] = 0.1 * jax.random.normal(keys[8], (dims[0], dims[1]), jnp.float32)
    params["b1"] = 0.01 * jax.random.normal(keys[9], (1, dims[1]), jnp.float32)
    params["w2"] = 0.1 * jax.random.normal(keys[10], (dims[1], dims[2]), jnp.float32)
    params["b2"] = 0.01 * jax.random.normal(keys[11], (1, dims[2]), jnp.float32)
    params["wp"] = 0.1 * jax.random.normal(keys[12], (dims[2], pred_dim), jnp.float32)
    params["bp"] = 0.01 * jax.random.normal(keys[13], (1, pred_dim), jnp.float32)
    return params


# -------------------------------------------------------------------- main ---
if __name__ == "__main__":
    config = {
        "column_idx": {"cat_a": 0, "cat_b": 1, "cont_a": 2, "cont_b": 3},
        "embed_input": [("cat_a", 5, 8), ("cat_b", 7, 8)],   # (col, vocab, dim)
        "continuous_cols": ["cont_a", "cont_b"],
        "mlp_hidden_dims": [32, 16],
        "pred_dim": 1,
    }

    key = jax.random.PRNGKey(0)
    kp, kc1, kc2, kx = jax.random.split(key, 4)
    params = init_params(kp, config)

    B = 1024
    cat_a = jax.random.randint(kc1, (B,), 0, 6).astype(jnp.float32)   # vocab 5 -> [0,5]
    cat_b = jax.random.randint(kc2, (B,), 0, 8).astype(jnp.float32)   # vocab 7 -> [0,7]
    cont = jax.random.normal(kx, (B, 2), jnp.float32)
    X = jnp.stack([cat_a, cat_b, cont[:, 0], cont[:, 1]], axis=1)     # (B, 4)

    out = tabmlp_forward(X, params, config, tb=256)   # grid = 4 (>= 2 tiles for v7x)
    jax.block_until_ready(out)
    assert out.shape == (B, config["pred_dim"]) and out.dtype == jnp.float32

    # pure-JAX f32 reference of the same (eval-mode) forward
    x_emb = jnp.concatenate(
        [jnp.take(params["emb"][c], X[:, config["column_idx"][c]].astype(jnp.int32), axis=0)
         for c, _, _ in config["embed_input"]], axis=1)
    bn = params["cont_norm"]
    x_cont = (X[:, 2:4] - bn["mean"]) / jnp.sqrt(bn["var"] + 1e-5) * bn["gamma"] + bn["beta"]
    xr = jnp.concatenate([x_emb, x_cont], axis=1)
    h = jnp.maximum(xr @ params["w1"] + params["b1"], 0.0)
    h = jnp.maximum(h @ params["w2"] + params["b2"], 0.0)
    ref = h @ params["wp"] + params["bp"]
    # bf16 x/weight streams vs f32 reference -> loose-but-meaningful tolerance
    assert jnp.allclose(out, ref, atol=2e-2, rtol=2e-2), \
        float(jnp.max(jnp.abs(out - ref)))

    print("KERNEL_OK")
</pallas_src>

<mosaic_0001>
module attributes {stable_mosaic.version = 11 : i64} {
  func.func @_tabmlp_kernel(%arg0: i32, %arg1: memref<256x2xi32, #tpu.memory_space<vmem>>, %arg2: memref<256x2xbf16, #tpu.memory_space<vmem>>, %arg3: memref<14x32xbf16, #tpu.memory_space<vmem>>, %arg4: memref<2x32xbf16, #tpu.memory_space<vmem>>, %arg5: memref<1x32xf32, #tpu.memory_space<vmem>>, %arg6: memref<32x16xbf16, #tpu.memory_space<vmem>>, %arg7: memref<1x16xf32, #tpu.memory_space<vmem>>, %arg8: memref<16x1xbf16, #tpu.memory_space<vmem>>, %arg9: memref<1x1xf32, #tpu.memory_space<vmem>>, %arg10: memref<256x1xf32, #tpu.memory_space<vmem>>) attributes {dimension_semantics = [#tpu.dimension_semantics<parallel>], iteration_bounds = array<i64: 4>, scalar_prefetch = 0 : i64, scratch_operands = 0 : i64, tpu.core_type = #tpu.core_type<tc>, window_params = [{transform_indices = @transform_0, window_bounds = array<i64: 256, 2>}, {transform_indices = @transform_1, window_bounds = array<i64: 256, 2>}, {pipeline_mode = #tpu.pipeline_mode<synchronous>, transform_indices = @transform_2, window_bounds = array<i64: 14, 32>}, {pipeline_mode = #tpu.pipeline_mode<synchronous>, transform_indices = @transform_3, window_bounds = array<i64: 2, 32>}, {pipeline_mode = #tpu.pipeline_mode<synchronous>, transform_indices = @transform_4, window_bounds = array<i64: 1, 32>}, {pipeline_mode = #tpu.pipeline_mode<synchronous>, transform_indices = @transform_5, window_bounds = array<i64: 32, 16>}, {pipeline_mode = #tpu.pipeline_mode<synchronous>, transform_indices = @transform_6, window_bounds = array<i64: 1, 16>}, {pipeline_mode = #tpu.pipeline_mode<synchronous>, transform_indices = @transform_7, window_bounds = array<i64: 16, 1>}, {pipeline_mode = #tpu.pipeline_mode<synchronous>, transform_indices = @transform_8, window_bounds = array<i64: 1, 1>}, {transform_indices = @transform_9, window_bounds = array<i64: 256, 1>}]} {
    %c0 = arith.constant 0 : index
    %c0_0 = arith.constant 0 : index
    %0 = vector.load %arg1[%c0, %c0_0] : memref<256x2xi32, #tpu.memory_space<vmem>>, vector<256x2xi32>
    %1 = tpu.iota {dimensions = array<i32: 1>} : vector<256x14xi32>
    %cst = arith.constant 0.000000e+00 : f32
    %2 = vector.broadcast %cst : f32 to vector<256x14xf32>
    %3 = vector.extract_strided_slice %0 {offsets = [0, 0], sizes = [256, 1], strides = [1, 1]} : vector<256x2xi32> to vector<256x1xi32>
    %4 = vector.broadcast %3 : vector<256x1xi32> to vector<256x14xi32>
    %5 = arith.cmpi eq, %1, %4 : vector<256x14xi32>
    %6 = arith.extui %5 : vector<256x14xi1> to vector<256x14xi32>
    %7 = arith.sitofp %6 : vector<256x14xi32> to vector<256x14xf32>
    %8 = arith.addf %2, %7 : vector<256x14xf32>
    %9 = vector.extract_strided_slice %0 {offsets = [0, 1], sizes = [256, 1], strides = [1, 1]} : vector<256x2xi32> to vector<256x1xi32>
    %10 = vector.broadcast %9 : vector<256x1xi32> to vector<256x14xi32>
    %11 = arith.cmpi eq, %1, %10 : vector<256x14xi32>
    %12 = arith.extui %11 : vector<256x14xi1> to vector<256x14xi32>
    %13 = arith.sitofp %12 : vector<256x14xi32> to vector<256x14xf32>
    %14 = arith.addf %8, %13 : vector<256x14xf32>
    %15 = arith.truncf %14 : vector<256x14xf32> to vector<256x14xbf16>
    %c0_1 = arith.constant 0 : index
    %c0_2 = arith.constant 0 : index
    %16 = vector.load %arg3[%c0_1, %c0_2] : memref<14x32xbf16, #tpu.memory_space<vmem>>, vector<14x32xbf16>
    %cst_3 = arith.constant dense<0.000000e+00> : vector<256x32xf32>
    %17 = tpu.matmul %15, %16, %cst_3 {dimension_numbers = #tpu.dot_dimension_numbers<[1], [0], [0], [1], [0, 0, 1, 1], [], []>} : vector<256x14xbf16>, vector<14x32xbf16>, vector<256x32xf32> -> vector<256x32xf32>
    %c0_4 = arith.constant 0 : index
    %c0_5 = arith.constant 0 : index
    %18 = vector.load %arg2[%c0_4, %c0_5] : memref<256x2xbf16, #tpu.memory_space<vmem>>, vector<256x2xbf16>
    %c0_6 = arith.constant 0 : index
    %c0_7 = arith.constant 0 : index
    %19 = vector.load %arg4[%c0_6, %c0_7] : memref<2x32xbf16, #tpu.memory_space<vmem>>, vector<2x32xbf16>
    %cst_8 = arith.constant dense<0.000000e+00> : vector<256x32xf32>
    %20 = tpu.matmul %18, %19, %cst_8 {dimension_numbers = #tpu.dot_dimension_numbers<[1], [0], [0], [1], [0, 0, 1, 1], [], []>} : vector<256x2xbf16>, vector<2x32xbf16>, vector<256x32xf32> -> vector<256x32xf32>
    %21 = arith.addf %17, %20 : vector<256x32xf32>
    %c0_9 = arith.constant 0 : index
    %c0_10 = arith.constant 0 : index
    %22 = vector.load %arg5[%c0_9, %c0_10] : memref<1x32xf32, #tpu.memory_space<vmem>>, vector<1x32xf32>
    %23 = vector.broadcast %22 : vector<1x32xf32> to vector<256x32xf32>
    %24 = arith.addf %21, %23 : vector<256x32xf32>
    %cst_11 = arith.constant 0.000000e+00 : f32
    %25 = vector.broadcast %cst_11 : f32 to vector<256x32xf32>
    %26 = arith.maximumf %24, %25 : vector<256x32xf32>
    %27 = arith.truncf %26 : vector<256x32xf32> to vector<256x32xbf16>
    %c0_12 = arith.constant 0 : index
    %c0_13 = arith.constant 0 : index
    %28 = vector.load %arg6[%c0_12, %c0_13] : memref<32x16xbf16, #tpu.memory_space<vmem>>, vector<32x16xbf16>
    %cst_14 = arith.constant dense<0.000000e+00> : vector<256x16xf32>
    %29 = tpu.matmul %27, %28, %cst_14 {dimension_numbers = #tpu.dot_dimension_numbers<[1], [0], [0], [1], [0, 0, 1, 1], [], []>} : vector<256x32xbf16>, vector<32x16xbf16>, vector<256x16xf32> -> vector<256x16xf32>
    %c0_15 = arith.constant 0 : index
    %c0_16 = arith.constant 0 : index
    %30 = vector.load %arg7[%c0_15, %c0_16] : memref<1x16xf32, #tpu.memory_space<vmem>>, vector<1x16xf32>
    %31 = vector.broadcast %30 : vector<1x16xf32> to vector<256x16xf32>
    %32 = arith.addf %29, %31 : vector<256x16xf32>
    %cst_17 = arith.constant 0.000000e+00 : f32
    %33 = vector.broadcast %cst_17 : f32 to vector<256x16xf32>
    %34 = arith.maximumf %32, %33 : vector<256x16xf32>
    %35 = arith.truncf %34 : vector<256x16xf32> to vector<256x16xbf16>
    %c0_18 = arith.constant 0 : index
    %c0_19 = arith.constant 0 : index
    %36 = vector.load %arg8[%c0_18, %c0_19] : memref<16x1xbf16, #tpu.memory_space<vmem>>, vector<16x1xbf16>
    %cst_20 = arith.constant dense<0.000000e+00> : vector<256x1xf32>
    %37 = tpu.matmul %35, %36, %cst_20 {dimension_numbers = #tpu.dot_dimension_numbers<[1], [0], [0], [1], [0, 0, 1, 1], [], []>} : vector<256x16xbf16>, vector<16x1xbf16>, vector<256x1xf32> -> vector<256x1xf32>
    %c0_21 = arith.constant 0 : index
    %c0_22 = arith.constant 0 : index
    %38 = vector.load %arg9[%c0_21, %c0_22] : memref<1x1xf32, #tpu.memory_space<vmem>>, vector<1x1xf32>
    %39 = vector.broadcast %38 : vector<1x1xf32> to vector<256x1xf32>
    %40 = arith.addf %37, %39 : vector<256x1xf32>
    %c0_23 = arith.constant 0 : index
    %c0_24 = arith.constant 0 : index
    %41 = vector.load %arg10[%c0_23, %c0_24] : memref<256x1xf32, #tpu.memory_space<vmem>>, vector<256x1xf32>
    tpu.vector_store %arg10[%c0_23, %c0_24], %40 {strides = array<i32>} : memref<256x1xf32, #tpu.memory_space<vmem>>, vector<256x1xf32>,
    return
  }
  func.func @transform_0(%arg0: i32) -> (i32, i32) {
    %c0_i32 = arith.constant 0 : i32
    %c0_i32_0 = arith.constant 0 : i32
    return %arg0, %c0_i32 : i32, i32
  }
  func.func @transform_1(%arg0: i32) -> (i32, i32) {
    %c0_i32 = arith.constant 0 : i32
    %c0_i32_0 = arith.constant 0 : i32
    return %arg0, %c0_i32 : i32, i32
  }
  func.func @transform_2(%arg0: i32) -> (i32, i32) {
    %c0_i32 = arith.constant 0 : i32
    %c0_i32_0 = arith.constant 0 : i32
    %c0_i32_1 = arith.constant 0 : i32
    return %c0_i32, %c0_i32_0 : i32, i32
  }
  func.func @transform_3(%arg0: i32) -> (i32, i32) {
    %c0_i32 = arith.constant 0 : i32
    %c0_i32_0 = arith.constant 0 : i32
    %c0_i32_1 = arith.constant 0 : i32
    return %c0_i32, %c0_i32_0 : i32, i32
  }
  func.func @transform_4(%arg0: i32) -> (i32, i32) {
    %c0_i32 = arith.constant 0 : i32
    %c0_i32_0 = arith.constant 0 : i32
    %c0_i32_1 = arith.constant 0 : i32
    return %c0_i32, %c0_i32_0 : i32, i32
  }
  func.func @transform_5(%arg0: i32) -> (i32, i32) {
    %c0_i32 = arith.constant 0 : i32
    %c0_i32_0 = arith.constant 0 : i32
    %c0_i32_1 = arith.constant 0 : i32
    return %c0_i32, %c0_i32_0 : i32, i32
  }
  func.func @transform_6(%arg0: i32) -> (i32, i32) {
    %c0_i32 = arith.constant 0 : i32
    %c0_i32_0 = arith.constant 0 : i32
    %c0_i32_1 = arith.constant 0 : i32
    return %c0_i32, %c0_i32_0 : i32, i32
  }
  func.func @transform_7(%arg0: i32) -> (i32, i32) {
    %c0_i32 = arith.constant 0 : i32
    %c0_i32_0 = arith.constant 0 : i32
    %c0_i32_1 = arith.constant 0 : i32
    return %c0_i32, %c0_i32_0 : i32, i32
  }
  func.func @transform_8(%arg0: i32) -> (i32, i32) {
    %c0_i32 = arith.constant 0 : i32
    %c0_i32_0 = arith.constant 0 : i32
    %c0_i32_1 = arith.constant 0 : i32
    return %c0_i32, %c0_i32_0 : i32, i32
  }
  func.func @transform_9(%arg0: i32) -> (i32, i32) {
    %c0_i32 = arith.constant 0 : i32
    %c0_i32_0 = arith.constant 0 : i32
    return %arg0, %c0_i32 : i32, i32
  }
}

</mosaic_0001>

<llo_original>
// kernel: tpu_custom_call.1
$region0: #{tpu_custom_call.1}
  #allocation0 [shape = 'u32[]', space=smem, size = 0x4, offset = 0x4, fixed_abs, tag = 'smem constant byte address 0x4 - core index']
  #allocation1 [shape = 'u32[144,128]{1,0:T(1,128)}', space=vmem, size = 0x12000, scoped, tag = 'internal scratch']
  #allocation2 [shape = 'f32[1,1]{1,0:T(1,128)S(1)}', space=vmem, size = 0x200, scoped, tag = 'scoped memory for tpu_custom_call.1']
  %s0 = inlined_call_operand.vmem [shape: s32[1024,2], index: 0, kind: input, shape index: {}]
  %s1 = inlined_call_operand.vmem [shape: bf16[1024,2], index: 1, kind: input, shape index: {}]
  %s2 = inlined_call_operand.vmem [shape: bf16[14,32], index: 2, kind: input, shape index: {}]
  %s3 = inlined_call_operand.vmem [shape: bf16[2,32], index: 3, kind: input, shape index: {}]
  %s4 = inlined_call_operand.vmem [shape: f32[1,32], index: 4, kind: input, shape index: {}]
  %s5 = inlined_call_operand.vmem [shape: bf16[32,16], index: 5, kind: input, shape index: {}]
  %s6 = inlined_call_operand.vmem [shape: f32[1,16], index: 6, kind: input, shape index: {}]
  %s7 = inlined_call_operand.vmem [shape: bf16[16,1], index: 7, kind: input, shape index: {}]
  %s8 = inlined_call_operand.<no memory space> [shape: f32[1,1], index: 8, kind: input, shape index: {}]
  %s9 = inlined_call_operand.vmem [shape: f32[1024,1], index: 9, kind: output, shape index: {}]
  %s10 = sld [smem:[#allocation0]]
  $region69: #{tpu_custom_call.1} parent=0
    _
  %s12 = ssub.s32 1, %s10
  %s13 = scalar_select 0, %s12, %s10
  %v14 = vstv %s8
  %15 = vst [vmem:[#allocation2] sm:$0x1] %v14
  loop: start=0, step=1, limit=6
  $region2: #{tpu_custom_call.1} parent=0 // loop_pre_header
    _
  $region3: #{tpu_custom_call.1} parent=0 // loop_header
    %s17 = sphi 0, %s21
    %p18 = scmp.ge.s32.totalorder %s17, 6
    %s27 = sphi 0, %s29
    %s30 = sphi 0, %s27
    %s31 = sphi 0, %s30
    %s47 = sphi 0, %s31
    %s53 = sphi 0, %s55
    %s56 = sphi 0, %s53
    %s57 = sphi 0, %s56
    %s73 = sphi 0, %s57
    %s77 = sphi 0, %s77
    %s79 = sphi 0, %s77
    %s80 = sphi 0, %s79
    %s94 = sphi 0, %s80
    %s98 = sphi 0, %s98
    %s100 = sphi 0, %s98
    %s101 = sphi 0, %s100
    %s115 = sphi 0, %s101
    %s119 = sphi 0, %s119
    %s121 = sphi 0, %s119
    %s122 = sphi 0, %s121
    %s136 = sphi 0, %s122
    %s140 = sphi 0, %s140
    %s142 = sphi 0, %s140
    %s143 = sphi 0, %s142
    %s157 = sphi 0, %s143
    %s161 = sphi 0, %s161
    %s163 = sphi 0, %s161
    %s164 = sphi 0, %s163
    %s178 = sphi 0, %s164
    %s182 = sphi 0, %s182
    %s184 = sphi 0, %s182
    %s185 = sphi 0, %s184
    %s199 = sphi 0, %s185
    %s203 = sphi 0, %s203
    %s205 = sphi 0, %s203
    %s206 = sphi 0, %s205
    %s220 = sphi 0, %s206
    %s226 = sphi 0, %s228
    %s229 = sphi 0, %s226
    %s230 = sphi 0, %s229
    %s246 = sphi 0, %s230
  $region4: #{tpu_custom_call.1} parent=0 // loop_header_branch
    %20 = sbr.rel (%p18) target = $region8
  $region5: #{tpu_custom_call.1} parent=0 // loop_body
    %s22 = ssub.s32 %s17, 1
    %s23 = ssub.s32 %s17, 2
    %s24 = sadd.s32 %s17, 1
    %s25 = ssub.s32 %s17, %s24
    %p26 = scmp.eq.s32.totalorder %s25, 0
    %s28 = sadd.s32 %s27, 1
    %s29 = scalar_select %p26, %s27, %s28
    %p32 = pneg %p26
    %p33 = scmp.eq.s32.totalorder %s17, 3
    %p34 = por %p32, %p33
    %p35 = scmp.ne.s32.totalorder %s27, %s30
    %p36 = scmp.eq.s32.totalorder %s17, 0
    %p37 = por %p35, %p36
    %p38 = scmp.ne.s32.totalorder %s27, %s30
    %p39 = scmp.eq.s32.totalorder %s22, 3
    %p40 = por %p38, %p39
    %p41 = scmp.ne.s32.totalorder %s30, %s31
    %p42 = scmp.eq.s32.totalorder %s22, 0
    %p43 = por %p41, %p42
    %p44 = scmp.ne.s32.totalorder %s30, %s31
    %p45 = scmp.eq.s32.totalorder %s23, 3
    %p46 = por %p44, %p45
    %p48 = scmp.ne.s32.totalorder %s31, %s47
    %p49 = scmp.eq.s32.totalorder %s23, 0
    %p50 = por %p48, %p49
    %s51 = ssub.s32 %s17, %s24
    %p52 = scmp.eq.s32.totalorder %s51, 0
    %s54 = sadd.s32 %s53, 1
    %s55 = scalar_select %p52, %s53, %s54
    %p58 = pneg %p52
    %p59 = scmp.eq.s32.totalorder %s17, 3
    %p60 = por %p58, %p59
    %p61 = scmp.ne.s32.totalorder %s53, %s56
    %p62 = scmp.eq.s32.totalorder %s17, 0
    %p63 = por %p61, %p62
    %p64 = scmp.ne.s32.totalorder %s53, %s56
    %p65 = scmp.eq.s32.totalorder %s22, 3
    %p66 = por %p64, %p65
    %p67 = scmp.ne.s32.totalorder %s56, %s57
    %p68 = scmp.eq.s32.totalorder %s22, 0
    %p69 = por %p67, %p68
    %p70 = scmp.ne.s32.totalorder %s56, %s57
    %p71 = scmp.eq.s32.totalorder %s23, 3
    %p72 = por %p70, %p71
    %p74 = scmp.ne.s32.totalorder %s57, %s73
    %p75 = scmp.eq.s32.totalorder %s23, 0
    %p76 = por %p74, %p75
    %s78 = sadd.s32 %s77, 1
    %p81 = scmp.eq.s32.totalorder %s17, 3
    %p82 = scmp.ne.s32.totalorder %s77, %s79
    %p83 = scmp.eq.s32.totalorder %s17, 0
    %p84 = por %p82, %p83
    %p85 = scmp.ne.s32.totalorder %s77, %s79
    %p86 = scmp.eq.s32.totalorder %s22, 3
    %p87 = por %p85, %p86
    %p88 = scmp.ne.s32.totalorder %s79, %s80
    %p89 = scmp.eq.s32.totalorder %s22, 0
    %p90 = por %p88, %p89
    %p91 = scmp.ne.s32.totalorder %s79, %s80
    %p92 = scmp.eq.s32.totalorder %s23, 3
    %p93 = por %p91, %p92
    %p95 = scmp.ne.s32.totalorder %s80, %s94
    %p96 = scmp.eq.s32.totalorder %s23, 0
    %p97 = por %p95, %p96
    %s99 = sadd.s32 %s98, 1
    %p102 = scmp.eq.s32.totalorder %s17, 3
    %p103 = scmp.ne.s32.totalorder %s98, %s100
    %p104 = scmp.eq.s32.totalorder %s17, 0
    %p105 = por %p103, %p104
    %p106 = scmp.ne.s32.totalorder %s98, %s100
    %p107 = scmp.eq.s32.totalorder %s22, 3
    %p108 = por %p106, %p107
    %p109 = scmp.ne.s32.totalorder %s100, %s101
    %p110 = scmp.eq.s32.totalorder %s22, 0
    %p111 = por %p109, %p110
    %p112 = scmp.ne.s32.totalorder %s100, %s101
    %p113 = scmp.eq.s32.totalorder %s23, 3
    %p114 = por %p112, %p113
    %p116 = scmp.ne.s32.totalorder %s101, %s115
    %p117 = scmp.eq.s32.totalorder %s23, 0
    %p118 = por %p116, %p117
    %s120 = sadd.s32 %s119, 1
    %p123 = scmp.eq.s32.totalorder %s17, 3
    %p124 = scmp.ne.s32.totalorder %s119, %s121
    %p125 = scmp.eq.s32.totalorder %s17, 0
    %p126 = por %p124, %p125
    %p127 = scmp.ne.s32.totalorder %s119, %s121
    %p128 = scmp.eq.s32.totalorder %s22, 3
    %p129 = por %p127, %p128
    %p130 = scmp.ne.s32.totalorder %s121, %s122
    %p131 = scmp.eq.s32.totalorder %s22, 0
    %p132 = por %p130, %p131
    %p133 = scmp.ne.s32.totalorder %s121, %s122
    %p134 = scmp.eq.s32.totalorder %s23, 3
    %p135 = por %p133, %p134
    %p137 = scmp.ne.s32.totalorder %s122, %s136
    %p138 = scmp.eq.s32.totalorder %s23, 0
    %p139 = por %p137, %p138
    %s141 = sadd.s32 %s140, 1
    %p144 = scmp.eq.s32.totalorder %s17, 3
    %p145 = scmp.ne.s32.totalorder %s140, %s142
    %p146 = scmp.eq.s32.totalorder %s17, 0
    %p147 = por %p145, %p146
    %p148 = scmp.ne.s32.totalorder %s140, %s142
    %p149 = scmp.eq.s32.totalorder %s22, 3
    %p150 = por %p148, %p149
    %p151 = scmp.ne.s32.totalorder %s142, %s143
    %p152 = scmp.eq.s32.totalorder %s22, 0
    %p153 = por %p151, %p152
    %p154 = scmp.ne.s32.totalorder %s142, %s143
    %p155 = scmp.eq.s32.totalorder %s23, 3
    %p156 = por %p154, %p155
    %p158 = scmp.ne.s32.totalorder %s143, %s157
    %p159 = scmp.eq.s32.totalorder %s23, 0
    %p160 = por %p158, %p159
    %s162 = sadd.s32 %s161, 1
    %p165 = scmp.eq.s32.totalorder %s17, 3
    %p166 = scmp.ne.s32.totalorder %s161, %s163
    %p167 = scmp.eq.s32.totalorder %s17, 0
    %p168 = por %p166, %p167
    %p169 = scmp.ne.s32.totalorder %s161, %s163
    %p170 = scmp.eq.s32.totalorder %s22, 3
    %p171 = por %p169, %p170
    %p172 = scmp.ne.s32.totalorder %s163, %s164
    %p173 = scmp.eq.s32.totalorder %s22, 0
    %p174 = por %p172, %p173
    %p175 = scmp.ne.s32.totalorder %s163, %s164
    %p176 = scmp.eq.s32.totalorder %s23, 3
    %p177 = por %p175, %p176
    %p179 = scmp.ne.s32.totalorder %s164, %s178
    %p180 = scmp.eq.s32.totalorder %s23, 0
    %p181 = por %p179, %p180
    %s183 = sadd.s32 %s182, 1
    %p186 = scmp.eq.s32.totalorder %s17, 3
    %p187 = scmp.ne.s32.totalorder %s182, %s184
    %p188 = scmp.eq.s32.totalorder %s17, 0
    %p189 = por %p187, %p188
    %p190 = scmp.ne.s32.totalorder %s182, %s184
    %p191 = scmp.eq.s32.totalorder %s22, 3
    %p192 = por %p190, %p191
    %p193 = scmp.ne.s32.totalorder %s184, %s185
    %p194 = scmp.eq.s32.totalorder %s22, 0
    %p195 = por %p193, %p194
    %p196 = scmp.ne.s32.totalorder %s184, %s185
    %p197 = scmp.eq.s32.totalorder %s23, 3
    %p198 = por %p196, %p197
    %p200 = scmp.ne.s32.totalorder %s185, %s199
    %p201 = scmp.eq.s32.totalorder %s23, 0
    %p202 = por %p200, %p201
    %s204 = sadd.s32 %s203, 1
    %p207 = scmp.eq.s32.totalorder %s17, 3
    %p208 = scmp.ne.s32.totalorder %s203, %s205
    %p209 = scmp.eq.s32.totalorder %s17, 0
    %p210 = por %p208, %p209
    %p211 = scmp.ne.s32.totalorder %s203, %s205
    %p212 = scmp.eq.s32.totalorder %s22, 3
    %p213 = por %p211, %p212
    %p214 = scmp.ne.s32.totalorder %s205, %s206
    %p215 = scmp.eq.s32.totalorder %s22, 0
    %p216 = por %p214, %p215
    %p217 = scmp.ne.s32.totalorder %s205, %s206
    %p218 = scmp.eq.s32.totalorder %s23, 3
    %p219 = por %p217, %p218
    %p221 = scmp.ne.s32.totalorder %s206, %s220
    %p222 = scmp.eq.s32.totalorder %s23, 0
    %p223 = por %p221, %p222
    %s224 = ssub.s32 %s17, %s24
    %p225 = scmp.eq.s32.totalorder %s224, 0
    %s227 = sadd.s32 %s226, 1
    %s228 = scalar_select %p225, %s226, %s227
    %p231 = pneg %p225
    %p232 = scmp.eq.s32.totalorder %s17, 3
    %p233 = por %p231, %p232
    %p234 = scmp.ne.s32.totalorder %s226, %s229
    %p235 = scmp.eq.s32.totalorder %s17, 0
    %p236 = por %p234, %p235
    %p237 = scmp.ne.s32.totalorder %s226, %s229
    %p238 = scmp.eq.s32.totalorder %s22, 3
    %p239 = por %p237, %p238
    %p240 = scmp.ne.s32.totalorder %s229, %s230
    %p241 = scmp.eq.s32.totalorder %s22, 0
    %p242 = por %p240, %p241
    %p243 = scmp.ne.s32.totalorder %s229, %s230
    %p244 = scmp.eq.s32.totalorder %s23, 3
    %p245 = por %p243, %p244
    %p247 = scmp.ne.s32.totalorder %s230, %s246
    %p248 = scmp.eq.s32.totalorder %s23, 0
    %p249 = por %p247, %p248
    %p250 = scmp.le.s32.totalorder 1, %s17
    %p251 = scmp.lt.s32.totalorder %s17, 5
    %p252 = pnand %p250, %p251
    %p253 = pneg %p252
    // Predicated region
    $region9: #{tpu_custom_call.1} parent=5 // pred_check
      _
    $region10: #{tpu_custom_call.1} parent=5 // pred_check_branch
      %255 = sbr.rel (%p252) target = $region12
    $region11: #{tpu_custom_call.1} parent=5 // pred_region
      %s256 = ssub.s32 %s17, 1
      // Predicated region
      $region13: #{tpu_custom_call.1} parent=11 // pred_check
        %p257 = pneg %p90
      $region14: #{tpu_custom_call.1} parent=11 // pred_check_branch
        %259 = sbr.rel (%p257) target = $region16
      $region15: #{tpu_custom_call.1} parent=11 // pred_region
        _
      $region16: #{tpu_custom_call.1} parent=11 // pred_fallthru
        _
      // Predicated region
      $region17: #{tpu_custom_call.1} parent=11 // pred_check
        %p260 = pneg %p111
      $region18: #{tpu_custom_call.1} parent=11 // pred_check_branch
        %262 = sbr.rel (%p260) target = $region20
      $region19: #{tpu_custom_call.1} parent=11 // pred_region
        _
      $region20: #{tpu_custom_call.1} parent=11 // pred_fallthru
        _
      // Predicated region
      $region21: #{tpu_custom_call.1} parent=11 // pred_check
        %p263 = pneg %p132
      $region22: #{tpu_custom_call.1} parent=11 // pred_check_branch
        %265 = sbr.rel (%p263) target = $region24
      $region23: #{tpu_custom_call.1} parent=11 // pred_region
        _
      $region24: #{tpu_custom_call.1} parent=11 // pred_fallthru
        _
      // Predicated region
      $region25: #{tpu_custom_call.1} parent=11 // pred_check
        %p266 = pneg %p153
      $region26: #{tpu_custom_call.1} parent=11 // pred_check_branch
        %268 = sbr.rel (%p266) target = $region28
      $region27: #{tpu_custom_call.1} parent=11 // pred_region
        _
      $region28: #{tpu_custom_call.1} parent=11 // pred_fallthru
        _
      // Predicated region
      $region29: #{tpu_custom_call.1} parent=11 // pred_check
        %p269 = pneg %p174
      $region30: #{tpu_custom_call.1} parent=11 // pred_check_branch
        %271 = sbr.rel (%p269) target = $region32
      $region31: #{tpu_custom_call.1} parent=11 // pred_region
        _
      $region32: #{tpu_custom_call.1} parent=11 // pred_fallthru
        _
      // Predicated region
      $region33: #{tpu_custom_call.1} parent=11 // pred_check
        %p272 = pneg %p195
      $region34: #{tpu_custom_call.1} parent=11 // pred_check_branch
        %274 = sbr.rel (%p272) target = $region36
      $region35: #{tpu_custom_call.1} parent=11 // pred_region
        _
      $region36: #{tpu_custom_call.1} parent=11 // pred_fallthru
        _
      // Predicated region
      $region37: #{tpu_custom_call.1} parent=11 // pred_check
        %p275 = pneg %p216
      $region38: #{tpu_custom_call.1} parent=11 // pred_check_branch
        %277 = sbr.rel (%p275) target = $region40
      $region39: #{tpu_custom_call.1} parent=11 // pred_region
        _
      $region40: #{tpu_custom_call.1} parent=11 // pred_fallthru
        _
    $region12: #{tpu_custom_call.1} parent=5 // pred_fallthru
      _
    %p278 = scmp.lt.s32.totalorder %s17, 4
    // Predicated region
    $region41: #{tpu_custom_call.1} parent=5 // pred_check
      %p279 = pneg %p278
    $region42: #{tpu_custom_call.1} parent=5 // pred_check_branch
      %281 = sbr.rel (%p279) target = $region44
    $region43: #{tpu_custom_call.1} parent=5 // pred_region
      // Predicated region
      $region45: #{tpu_custom_call.1} parent=43 // pred_check
        %p282 = pneg %p37
      $region46: #{tpu_custom_call.1} parent=43 // pred_check_branch
        %284 = sbr.rel (%p282) target = $region48
      $region47: #{tpu_custom_call.1} parent=43 // pred_region
        %s285 = smul.u32 32, %s17
        %p286 = scmp.lt.s32.totalorder %s285, 127
        %s287 = scalar_select %p286, %s285, 127
        %s288 = smul.addr %s287, 8
        %s289 = scalar_lea.vmem %s0, %s288
        %s290 = smul.u32 32, %s17
      $region48: #{tpu_custom_call.1} parent=43 // pred_fallthru
        _
      // Predicated region
      $region49: #{tpu_custom_call.1} parent=43 // pred_check
        %p291 = pneg %p63
      $region50: #{tpu_custom_call.1} parent=43 // pred_check_branch
        %293 = sbr.rel (%p291) target = $region52
      $region51: #{tpu_custom_call.1} parent=43 // pred_region
        %s294 = smul.u32 32, %s17
        %p295 = scmp.lt.s32.totalorder %s294, 127
        %s296 = scalar_select %p295, %s294, 127
        %s297 = smul.addr %s296, 4
        %s298 = scalar_lea.vmem %s1, %s297
        %s299 = smul.u32 32, %s17
      $region52: #{tpu_custom_call.1} parent=43 // pred_fallthru
        _
    $region44: #{tpu_custom_call.1} parent=5 // pred_fallthru
      _
    %p300 = scmp.le.s32.totalorder 1, %s17
    %p301 = scmp.lt.s32.totalorder %s17, 5
    %p302 = pnand %p300, %p301
    %p303 = pneg %p302
    // Predicated region
    $region53: #{tpu_custom_call.1} parent=5 // pred_check
      _
    $region54: #{tpu_custom_call.1} parent=5 // pred_check_branch
      %305 = sbr.rel (%p302) target = $region56
    $region55: #{tpu_custom_call.1} parent=5 // pred_region
      %s306 = ssub.s32 %s17, 1
      %s307 = smul.u32 32, %s22
      %p308 = scmp.lt.s32.totalorder %s307, 127
      %s309 = scalar_select %p308, %s307, 127
      %s310 = smul.addr %s309, 8
      %s311 = scalar_lea.vmem %s0, %s310
      %p312 = pneg %p43
      %p313 = pneg %p40
      %s314 = smul.u32 32, %s22
      %p315 = scmp.lt.s32.totalorder %s314, 127
      %s316 = scalar_select %p315, %s314, 127
      %s317 = smul.addr %s316, 4
      %s318 = scalar_lea.vmem %s1, %s317
      %p319 = pneg %p69
      %p320 = pneg %p66
      %p321 = pneg %p90
      %p322 = pneg %p87
      %p323 = pneg %p111
      %p324 = pneg %p108
      %p325 = pneg %p132
      %p326 = pneg %p129
      %p327 = pneg %p153
      %p328 = pneg %p150
      %p329 = pneg %p174
      %p330 = pneg %p171
      %p331 = pneg %p195
      %p332 = pneg %p192
      %p333 = pneg %p216
      %p334 = pneg %p213
      %p335 = pneg %p242
      %p336 = pneg %p239
      %s337 = smul.u32 32, %s22
      %p338 = scmp.lt.s32.totalorder %s337, 127
      %s339 = scalar_select %p338, %s337, 127
      %s340 = smul.addr %s339, 8
      %s341 = scalar_lea.vmem %s9, %s340
      %s342 = smul.u32 32, %s22
      %p343 = scmp.lt.s32.totalorder %s342, 127
      %s344 = scalar_select %p343, %s342, 127
      %s345 = smul.addr %s344, 8
      %s346 = scalar_lea.vmem %s0, %s345
      %s347 = smul.u32 32, %s22
      %s348 = smul.u32 32, %s22
      %p349 = scmp.lt.s32.totalorder %s348, 127
      %s350 = scalar_select %p349, %s348, 127
      %s351 = smul.addr %s350, 4
      %s352 = scalar_lea.vmem %s1, %s351
      %s353 = smul.u32 32, %s22
      %s354 = smul.u32 32, %s22
      %p355 = scmp.lt.s32.totalorder %s354, 127
      %s356 = scalar_select %p355, %s354, 127
      %s357 = smul.addr %s356, 8
      %s358 = scalar_lea.vmem %s9, %s357
      %s359 = smul.u32 32, %s22
      %v361 = vld [vmem:[%s346] sm:$0xff]
      %v362 = vld [vmem:[%s346 + $0x8] sm:$0xff]
      %v363 = vld [vmem:[%s346 + $0x10] sm:$0xff]
      %v364 = vld [vmem:[%s346 + $0x18] sm:$0xff]
      %v365 = vld [vmem:[%s346 + $0x20] sm:$0xff]
      %v366 = vld [vmem:[%s346 + $0x28] sm:$0xff]
      %v367 = vld [vmem:[%s346 + $0x30] sm:$0xff]
      %v368 = vld [vmem:[%s346 + $0x38] sm:$0xff]
      %v369 = vld [vmem:[%s346 + $0x40] sm:$0xff]
      %v370 = vld [vmem:[%s346 + $0x48] sm:$0xff]
      %v371 = vld [vmem:[%s346 + $0x50] sm:$0xff]
      %v372 = vld [vmem:[%s346 + $0x58] sm:$0xff]
      %v373 = vld [vmem:[%s346 + $0x60] sm:$0xff]
      %v374 = vld [vmem:[%s346 + $0x68] sm:$0xff]
      %v375 = vld [vmem:[%s346 + $0x70] sm:$0xff]
      %v376 = vld [vmem:[%s346 + $0x78] sm:$0xff]
      %v377 = vld [vmem:[%s346 + $0x80] sm:$0xff]
      %v378 = vld [vmem:[%s346 + $0x88] sm:$0xff]
      %v379 = vld [vmem:[%s346 + $0x90] sm:$0xff]
      %v380 = vld [vmem:[%s346 + $0x98] sm:$0xff]
      %v381 = vld [vmem:[%s346 + $0xa0] sm:$0xff]
      %v382 = vld [vmem:[%s346 + $0xa8] sm:$0xff]
      %v383 = vld [vmem:[%s346 + $0xb0] sm:$0xff]
      %v384 = vld [vmem:[%s346 + $0xb8] sm:$0xff]
      %v385 = vld [vmem:[%s346 + $0xc0] sm:$0xff]
      %v386 = vld [vmem:[%s346 + $0xc8] sm:$0xff]
      %v387 = vld [vmem:[%s346 + $0xd0] sm:$0xff]
      %v388 = vld [vmem:[%s346 + $0xd8] sm:$0xff]
      %v389 = vld [vmem:[%s346 + $0xe0] sm:$0xff]
      %v390 = vld [vmem:[%s346 + $0xe8] sm:$0xff]
      %v391 = vld [vmem:[%s346 + $0xf0] sm:$0xff]
      %v392 = vld [vmem:[%s346 + $0xf8] sm:$0xff]
      %v393 = vlaneseq
      %v394 = vand.u32 %v393, 127
      %395 = vset.pattern.permute.xlu0 0
      %396 = vperm.xlu0 %395, %v361
      %v397 = vpop.permute.xlu0 %396
      %398 = vset.pattern.permute.xlu0 0
      %399 = vperm.xlu0 %398, %v362
      %v400 = vpop.permute.xlu0 %399
      %401 = vset.pattern.permute.xlu0 0
      %402 = vperm.xlu0 %401, %v363
      %v403 = vpop.permute.xlu0 %402
      %404 = vset.pattern.permute.xlu0 0
      %405 = vperm.xlu0 %404, %v364
      %v406 = vpop.permute.xlu0 %405
      %407 = vset.pattern.permute.xlu0 0
      %408 = vperm.xlu0 %407, %v365
      %v409 = vpop.permute.xlu0 %408
      %410 = vset.pattern.permute.xlu0 0
      %411 = vperm.xlu0 %410, %v366
      %v412 = vpop.permute.xlu0 %411
      %413 = vset.pattern.permute.xlu0 0
      %414 = vperm.xlu0 %413, %v367
      %v415 = vpop.permute.xlu0 %414
      %416 = vset.pattern.permute.xlu0 0
      %417 = vperm.xlu0 %416, %v368
      %v418 = vpop.permute.xlu0 %417
      %419 = vset.pattern.permute.xlu0 0
      %420 = vperm.xlu0 %419, %v369
      %v421 = vpop.permute.xlu0 %420
      %422 = vset.pattern.permute.xlu0 0
      %423 = vperm.xlu0 %422, %v370
      %v424 = vpop.permute.xlu0 %423
      %425 = vset.pattern.permute.xlu0 0
      %426 = vperm.xlu0 %425, %v371
      %v427 = vpop.permute.xlu0 %426
      %428 = vset.pattern.permute.xlu0 0
      %429 = vperm.xlu0 %428, %v372
      %v430 = vpop.permute.xlu0 %429
      %431 = vset.pattern.permute.xlu0 0
      %432 = vperm.xlu0 %431, %v373
      %v433 = vpop.permute.xlu0 %432
      %434 = vset.pattern.permute.xlu0 0
      %435 = vperm.xlu0 %434, %v374
      %v436 = vpop.permute.xlu0 %435
      %437 = vset.pattern.permute.xlu0 0
      %438 = vperm.xlu0 %437, %v375
      %v439 = vpop.permute.xlu0 %438
      %440 = vset.pattern.permute.xlu0 0
      %441 = vperm.xlu0 %440, %v376
      %v442 = vpop.permute.xlu0 %441
      %443 = vset.pattern.permute.xlu0 0
      %444 = vperm.xlu0 %443, %v377
      %v445 = vpop.permute.xlu0 %444
      %446 = vset.pattern.permute.xlu0 0
      %447 = vperm.xlu0 %446, %v378
      %v448 = vpop.permute.xlu0 %447
      %449 = vset.pattern.permute.xlu0 0
      %450 = vperm.xlu0 %449, %v379
      %v451 = vpop.permute.xlu0 %450
      %452 = vset.pattern.permute.xlu0 0
      %453 = vperm.xlu0 %452, %v380
      %v454 = vpop.permute.xlu0 %453
      %455 = vset.pattern.permute.xlu0 0
      %456 = vperm.xlu0 %455, %v381
      %v457 = vpop.permute.xlu0 %456
      %458 = vset.pattern.permute.xlu0 0
      %459 = vperm.xlu0 %458, %v382
      %v460 = vpop.permute.xlu0 %459
      %461 = vset.pattern.permute.xlu0 0
      %462 = vperm.xlu0 %461, %v383
      %v463 = vpop.permute.xlu0 %462
      %464 = vset.pattern.permute.xlu0 0
      %465 = vperm.xlu0 %464, %v384
      %v466 = vpop.permute.xlu0 %465
      %467 = vset.pattern.permute.xlu0 0
      %468 = vperm.xlu0 %467, %v385
      %v469 = vpop.permute.xlu0 %468
      %470 = vset.pattern.permute.xlu0 0
      %471 = vperm.xlu0 %470, %v386
      %v472 = vpop.permute.xlu0 %471
      %473 = vset.pattern.permute.xlu0 0
      %474 = vperm.xlu0 %473, %v387
      %v475 = vpop.permute.xlu0 %474
      %476 = vset.pattern.permute.xlu0 0
      %477 = vperm.xlu0 %476, %v388
      %v478 = vpop.permute.xlu0 %477
      %479 = vset.pattern.permute.xlu0 0
      %480 = vperm.xlu0 %479, %v389
      %v481 = vpop.permute.xlu0 %480
      %482 = vset.pattern.permute.xlu0 0
      %483 = vperm.xlu0 %482, %v390
      %v484 = vpop.permute.xlu0 %483
      %485 = vset.pattern.permute.xlu0 0
      %486 = vperm.xlu0 %485, %v391
      %v487 = vpop.permute.xlu0 %486
      %488 = vset.pattern.permute.xlu0 0
      %489 = vperm.xlu0 %488, %v392
      %v490 = vpop.permute.xlu0 %489
      %vm491 = vcmp.eq.s32.totalorder %v394, %v397
      %vm492 = vcmp.eq.s32.totalorder %v394, %v400
      %vm493 = vcmp.eq.s32.totalorder %v394, %v403
      %vm494 = vcmp.eq.s32.totalorder %v394, %v406
      %vm495 = vcmp.eq.s32.totalorder %v394, %v409
      %vm496 = vcmp.eq.s32.totalorder %v394, %v412
      %vm497 = vcmp.eq.s32.totalorder %v394, %v415
      %vm498 = vcmp.eq.s32.totalorder %v394, %v418
      %vm499 = vcmp.eq.s32.totalorder %v394, %v421
      %vm500 = vcmp.eq.s32.totalorder %v394, %v424
      %vm501 = vcmp.eq.s32.totalorder %v394, %v427
      %vm502 = vcmp.eq.s32.totalorder %v394, %v430
      %vm503 = vcmp.eq.s32.totalorder %v394, %v433
      %vm504 = vcmp.eq.s32.totalorder %v394, %v436
      %vm505 = vcmp.eq.s32.totalorder %v394, %v439
      %vm506 = vcmp.eq.s32.totalorder %v394, %v442
      %vm507 = vcmp.eq.s32.totalorder %v394, %v445
      %vm508 = vcmp.eq.s32.totalorder %v394, %v448
      %vm509 = vcmp.eq.s32.totalorder %v394, %v451
      %vm510 = vcmp.eq.s32.totalorder %v394, %v454
      %vm511 = vcmp.eq.s32.totalorder %v394, %v457
      %vm512 = vcmp.eq.s32.totalorder %v394, %v460
      %vm513 = vcmp.eq.s32.totalorder %v394, %v463
      %vm514 = vcmp.eq.s32.totalorder %v394, %v466
      %vm515 = vcmp.eq.s32.totalorder %v394, %v469
      %vm516 = vcmp.eq.s32.totalorder %v394, %v472
      %vm517 = vcmp.eq.s32.totalorder %v394, %v475
      %vm518 = vcmp.eq.s32.totalorder %v394, %v478
      %vm519 = vcmp.eq.s32.totalorder %v394, %v481
      %vm520 = vcmp.eq.s32.totalorder %v394, %v484
      %vm521 = vcmp.eq.s32.totalorder %v394, %v487
      %vm522 = vcmp.eq.s32.totalorder %v394, %v490
      %v523 = vsel %vm491, 1, 0
      %v524 = vsel %vm492, 1, 0
      %v525 = vsel %vm493, 1, 0
      %v526 = vsel %vm494, 1, 0
      %v527 = vsel %vm495, 1, 0
      %v528 = vsel %vm496, 1, 0
      %v529 = vsel %vm497, 1, 0
      %v530 = vsel %vm498, 1, 0
      %v531 = vsel %vm499, 1, 0
      %v532 = vsel %vm500, 1, 0
      %v533 = vsel %vm501, 1, 0
      %v534 = vsel %vm502, 1, 0
      %v535 = vsel %vm503, 1, 0
      %v536 = vsel %vm504, 1, 0
      %v537 = vsel %vm505, 1, 0
      %v538 = vsel %vm506, 1, 0
      %v539 = vsel %vm507, 1, 0
      %v540 = vsel %vm508, 1, 0
      %v541 = vsel %vm509, 1, 0
      %v542 = vsel %vm510, 1, 0
      %v543 = vsel %vm511, 1, 0
      %v544 = vsel %vm512, 1, 0
      %v545 = vsel %vm513, 1, 0
      %v546 = vsel %vm514, 1, 0
      %v547 = vsel %vm515, 1, 0
      %v548 = vsel %vm516, 1, 0
      %v549 = vsel %vm517, 1, 0
      %v550 = vsel %vm518, 1, 0
      %v551 = vsel %vm519, 1, 0
      %v552 = vsel %vm520, 1, 0
      %v553 = vsel %vm521, 1, 0
      %v554 = vsel %vm522, 1, 0
      %v555 = vcvt.s32.f32 %v523
      %v556 = vcvt.s32.f32 %v524
      %v557 = vcvt.s32.f32 %v525
      %v558 = vcvt.s32.f32 %v526
      %v559 = vcvt.s32.f32 %v527
      %v560 = vcvt.s32.f32 %v528
      %v561 = vcvt.s32.f32 %v529
      %v562 = vcvt.s32.f32 %v530
      %v563 = vcvt.s32.f32 %v531
      %v564 = vcvt.s32.f32 %v532
      %v565 = vcvt.s32.f32 %v533
      %v566 = vcvt.s32.f32 %v534
      %v567 = vcvt.s32.f32 %v535
      %v568 = vcvt.s32.f32 %v536
      %v569 = vcvt.s32.f32 %v537
      %v570 = vcvt.s32.f32 %v538
      %v571 = vcvt.s32.f32 %v539
      %v572 = vcvt.s32.f32 %v540
      %v573 = vcvt.s32.f32 %v541
      %v574 = vcvt.s32.f32 %v542
      %v575 = vcvt.s32.f32 %v543
      %v576 = vcvt.s32.f32 %v544
      %v577 = vcvt.s32.f32 %v545
      %v578 = vcvt.s32.f32 %v546
      %v579 = vcvt.s32.f32 %v547
      %v580 = vcvt.s32.f32 %v548
      %v581 = vcvt.s32.f32 %v549
      %v582 = vcvt.s32.f32 %v550
      %v583 = vcvt.s32.f32 %v551
      %v584 = vcvt.s32.f32 %v552
      %v585 = vcvt.s32.f32 %v553
      %v586 = vcvt.s32.f32 %v554
      %v587 = vadd.f32 %v555, 0.0
      %v588 = vadd.f32 %v556, 0.0
      %v589 = vadd.f32 %v557, 0.0
      %v590 = vadd.f32 %v558, 0.0
      %v591 = vadd.f32 %v559, 0.0
      %v592 = vadd.f32 %v560, 0.0
      %v593 = vadd.f32 %v561, 0.0
      %v594 = vadd.f32 %v562, 0.0
      %v595 = vadd.f32 %v563, 0.0
      %v596 = vadd.f32 %v564, 0.0
      %v597 = vadd.f32 %v565, 0.0
      %v598 = vadd.f32 %v566, 0.0
      %v599 = vadd.f32 %v567, 0.0
      %v600 = vadd.f32 %v568, 0.0
      %v601 = vadd.f32 %v569, 0.0
      %v602 = vadd.f32 %v570, 0.0
      %v603 = vadd.f32 %v571, 0.0
      %v604 = vadd.f32 %v572, 0.0
      %v605 = vadd.f32 %v573, 0.0
      %v606 = vadd.f32 %v574, 0.0
      %v607 = vadd.f32 %v575, 0.0
      %v608 = vadd.f32 %v576, 0.0
      %v609 = vadd.f32 %v577, 0.0
      %v610 = vadd.f32 %v578, 0.0
      %v611 = vadd.f32 %v579, 0.0
      %v612 = vadd.f32 %v580, 0.0
      %v613 = vadd.f32 %v581, 0.0
      %v614 = vadd.f32 %v582, 0.0
      %v615 = vadd.f32 %v583, 0.0
      %v616 = vadd.f32 %v584, 0.0
      %v617 = vadd.f32 %v585, 0.0
      %v618 = vadd.f32 %v586, 0.0
      %619 = vset.pattern.permute.xlu0 1
      %620 = vperm.xlu0 %619, %v361
      %v621 = vpop.permute.xlu0 %620
      %622 = vset.pattern.permute.xlu0 1
      %623 = vperm.xlu0 %622, %v362
      %v624 = vpop.permute.xlu0 %623
      %625 = vset.pattern.permute.xlu0 1
      %626 = vperm.xlu0 %625, %v363
      %v627 = vpop.permute.xlu0 %626
      %628 = vset.pattern.permute.xlu0 1
      %629 = vperm.xlu0 %628, %v364
      %v630 = vpop.permute.xlu0 %629
      %631 = vset.pattern.permute.xlu0 1
      %632 = vperm.xlu0 %631, %v365
      %v633 = vpop.permute.xlu0 %632
      %634 = vset.pattern.permute.xlu0 1
      %635 = vperm.xlu0 %634, %v366
      %v636 = vpop.permute.xlu0 %635
      %637 = vset.pattern.permute.xlu0 1
      %638 = vperm.xlu0 %637, %v367
      %v639 = vpop.permute.xlu0 %638
      %640 = vset.pattern.permute.xlu0 1
      %641 = vperm.xlu0 %640, %v368
      %v642 = vpop.permute.xlu0 %641
      %643 = vset.pattern.permute.xlu0 1
      %644 = vperm.xlu0 %643, %v369
      %v645 = vpop.permute.xlu0 %644
      %646 = vset.pattern.permute.xlu0 1
      %647 = vperm.xlu0 %646, %v370
      %v648 = vpop.permute.xlu0 %647
      %649 = vset.pattern.permute.xlu0 1
      %650 = vperm.xlu0 %649, %v371
      %v651 = vpop.permute.xlu0 %650
      %652 = vset.pattern.permute.xlu0 1
      %653 = vperm.xlu0 %652, %v372
      %v654 = vpop.permute.xlu0 %653
      %655 = vset.pattern.permute.xlu0 1
      %656 = vperm.xlu0 %655, %v373
      %v657 = vpop.permute.xlu0 %656
      %658 = vset.pattern.permute.xlu0 1
      %659 = vperm.xlu0 %658, %v374
      %v660 = vpop.permute.xlu0 %659
      %661 = vset.pattern.permute.xlu0 1
      %662 = vperm.xlu0 %661, %v375
      %v663 = vpop.permute.xlu0 %662
      %664 = vset.pattern.permute.xlu0 1
      %665 = vperm.xlu0 %664, %v376
      %v666 = vpop.permute.xlu0 %665
      %667 = vset.pattern.permute.xlu0 1
      %668 = vperm.xlu0 %667, %v377
      %v669 = vpop.permute.xlu0 %668
      %670 = vset.pattern.permute.xlu0 1
      %671 = vperm.xlu0 %670, %v378
      %v672 = vpop.permute.xlu0 %671
      %673 = vset.pattern.permute.xlu0 1
      %674 = vperm.xlu0 %673, %v379
      %v675 = vpop.permute.xlu0 %674
      %676 = vset.pattern.permute.xlu0 1
      %677 = vperm.xlu0 %676, %v380
      %v678 = vpop.permute.xlu0 %677
      %679 = vset.pattern.permute.xlu0 1
      %680 = vperm.xlu0 %679, %v381
      %v681 = vpop.permute.xlu0 %680
      %682 = vset.pattern.permute.xlu0 1
      %683 = vperm.xlu0 %682, %v382
      %v684 = vpop.permute.xlu0 %683
      %685 = vset.pattern.permute.xlu0 1
      %686 = vperm.xlu0 %685, %v383
      %v687 = vpop.permute.xlu0 %686
      %688 = vset.pattern.permute.xlu0 1
      %689 = vperm.xlu0 %688, %v384
      %v690 = vpop.permute.xlu0 %689
      %691 = vset.pattern.permute.xlu0 1
      %692 = vperm.xlu0 %691, %v385
      %v693 = vpop.permute.xlu0 %692
      %694 = vset.pattern.permute.xlu0 1
      %695 = vperm.xlu0 %694, %v386
      %v696 = vpop.permute.xlu0 %695
      %697 = vset.pattern.permute.xlu0 1
      %698 = vperm.xlu0 %697, %v387
      %v699 = vpop.permute.xlu0 %698
      %700 = vset.pattern.permute.xlu0 1
      %701 = vperm.xlu0 %700, %v388
      %v702 = vpop.permute.xlu0 %701
      %703 = vset.pattern.permute.xlu0 1
      %704 = vperm.xlu0 %703, %v389
      %v705 = vpop.permute.xlu0 %704
      %706 = vset.pattern.permute.xlu0 1
      %707 = vperm.xlu0 %706, %v390
      %v708 = vpop.permute.xlu0 %707
      %709 = vset.pattern.permute.xlu0 1
      %710 = vperm.xlu0 %709, %v391
      %v711 = vpop.permute.xlu0 %710
      %712 = vset.pattern.permute.xlu0 1
      %713 = vperm.xlu0 %712, %v392
      %v714 = vpop.permute.xlu0 %713
      %vm715 = vcmp.eq.s32.totalorder %v394, %v621
      %vm716 = vcmp.eq.s32.totalorder %v394, %v624
      %vm717 = vcmp.eq.s32.totalorder %v394, %v627
      %vm718 = vcmp.eq.s32.totalorder %v394, %v630
      %vm719 = vcmp.eq.s32.totalorder %v394, %v633
      %vm720 = vcmp.eq.s32.totalorder %v394, %v636
      %vm721 = vcmp.eq.s32.totalorder %v394, %v639
      %vm722 = vcmp.eq.s32.totalorder %v394, %v642
      %vm723 = vcmp.eq.s32.totalorder %v394, %v645
      %vm724 = vcmp.eq.s32.totalorder %v394, %v648
      %vm725 = vcmp.eq.s32.totalorder %v394, %v651
      %vm726 = vcmp.eq.s32.totalorder %v394, %v654
      %vm727 = vcmp.eq.s32.totalorder %v394, %v657
      %vm728 = vcmp.eq.s32.totalorder %v394, %v660
      %vm729 = vcmp.eq.s32.totalorder %v394, %v663
      %vm730 = vcmp.eq.s32.totalorder %v394, %v666
      %vm731 = vcmp.eq.s32.totalorder %v394, %v669
      %vm732 = vcmp.eq.s32.totalorder %v394, %v672
      %vm733 = vcmp.eq.s32.totalorder %v394, %v675
      %vm734 = vcmp.eq.s32.totalorder %v394, %v678
      %vm735 = vcmp.eq.s32.totalorder %v394, %v681
      %vm736 = vcmp.eq.s32.totalorder %v394, %v684
      %vm737 = vcmp.eq.s32.totalorder %v394, %v687
      %vm738 = vcmp.eq.s32.totalorder %v394, %v690
      %vm739 = vcmp.eq.s32.totalorder %v394, %v693
      %vm740 = vcmp.eq.s32.totalorder %v394, %v696
      %vm741 = vcmp.eq.s32.totalorder %v394, %v699
      %vm742 = vcmp.eq.s32.totalorder %v394, %v702
      %vm743 = vcmp.eq.s32.totalorder %v394, %v705
      %vm744 = vcmp.eq.s32.totalorder %v394, %v708
      %vm745 = vcmp.eq.s32.totalorder %v394, %v711
      %vm746 = vcmp.eq.s32.totalorder %v394, %v714
      %v747 = vsel %vm715, 1, 0
      %v748 = vsel %vm716, 1, 0
      %v749 = vsel %vm717, 1, 0
      %v750 = vsel %vm718, 1, 0
      %v751 = vsel %vm719, 1, 0
      %v752 = vsel %vm720, 1, 0
      %v753 = vsel %vm721, 1, 0
      %v754 = vsel %vm722, 1, 0
      %v755 = vsel %vm723, 1, 0
      %v756 = vsel %vm724, 1, 0
      %v757 = vsel %vm725, 1, 0
      %v758 = vsel %vm726, 1, 0
      %v759 = vsel %vm727, 1, 0
      %v760 = vsel %vm728, 1, 0
      %v761 = vsel %vm729, 1, 0
      %v762 = vsel %vm730, 1, 0
      %v763 = vsel %vm731, 1, 0
      %v764 = vsel %vm732, 1, 0
      %v765 = vsel %vm733, 1, 0
      %v766 = vsel %vm734, 1, 0
      %v767 = vsel %vm735, 1, 0
      %v768 = vsel %vm736, 1, 0
      %v769 = vsel %vm737, 1, 0
      %v770 = vsel %vm738, 1, 0
      %v771 = vsel %vm739, 1, 0
      %v772 = vsel %vm740, 1, 0
      %v773 = vsel %vm741, 1, 0
      %v774 = vsel %vm742, 1, 0
      %v775 = vsel %vm743, 1, 0
      %v776 = vsel %vm744, 1, 0
      %v777 = vsel %vm745, 1, 0
      %v778 = vsel %vm746, 1, 0
      %v779 = vcvt.s32.f32 %v747
      %v780 = vcvt.s32.f32 %v748
      %v781 = vcvt.s32.f32 %v749
      %v782 = vcvt.s32.f32 %v750
      %v783 = vcvt.s32.f32 %v751
      %v784 = vcvt.s32.f32 %v752
      %v785 = vcvt.s32.f32 %v753
      %v786 = vcvt.s32.f32 %v754
      %v787 = vcvt.s32.f32 %v755
      %v788 = vcvt.s32.f32 %v756
      %v789 = vcvt.s32.f32 %v757
      %v790 = vcvt.s32.f32 %v758
      %v791 = vcvt.s32.f32 %v759
      %v792 = vcvt.s32.f32 %v760
      %v793 = vcvt.s32.f32 %v761
      %v794 = vcvt.s32.f32 %v762
      %v795 = vcvt.s32.f32 %v763
      %v796 = vcvt.s32.f32 %v764
      %v797 = vcvt.s32.f32 %v765
      %v798 = vcvt.s32.f32 %v766
      %v799 = vcvt.s32.f32 %v767
      %v800 = vcvt.s32.f32 %v768
      %v801 = vcvt.s32.f32 %v769
      %v802 = vcvt.s32.f32 %v770
      %v803 = vcvt.s32.f32 %v771
      %v804 = vcvt.s32.f32 %v772
      %v805 = vcvt.s32.f32 %v773
      %v806 = vcvt.s32.f32 %v774
      %v807 = vcvt.s32.f32 %v775
      %v808 = vcvt.s32.f32 %v776
      %v809 = vcvt.s32.f32 %v777
      %v810 = vcvt.s32.f32 %v778
      %v811 = vadd.f32 %v587, %v779
      %v812 = vadd.f32 %v588, %v780
      %v813 = vadd.f32 %v589, %v781
      %v814 = vadd.f32 %v590, %v782
      %v815 = vadd.f32 %v591, %v783
      %v816 = vadd.f32 %v592, %v784
      %v817 = vadd.f32 %v593, %v785
      %v818 = vadd.f32 %v594, %v786
      %v819 = vadd.f32 %v595, %v787
      %v820 = vadd.f32 %v596, %v788
      %v821 = vadd.f32 %v597, %v789
      %v822 = vadd.f32 %v598, %v790
      %v823 = vadd.f32 %v599, %v791
      %v824 = vadd.f32 %v600, %v792
      %v825 = vadd.f32 %v601, %v793
      %v826 = vadd.f32 %v602, %v794
      %v827 = vadd.f32 %v603, %v795
      %v828 = vadd.f32 %v604, %v796
      %v829 = vadd.f32 %v605, %v797
      %v830 = vadd.f32 %v606, %v798
      %v831 = vadd.f32 %v607, %v799
      %v832 = vadd.f32 %v608, %v800
      %v833 = vadd.f32 %v609, %v801
      %v834 = vadd.f32 %v610, %v802
      %v835 = vadd.f32 %v611, %v803
      %v836 = vadd.f32 %v612, %v804
      %v837 = vadd.f32 %v613, %v805
      %v838 = vadd.f32 %v614, %v806
      %v839 = vadd.f32 %v615, %v807
      %v840 = vadd.f32 %v616, %v808
      %v841 = vadd.f32 %v617, %v809
      %v842 = vadd.f32 %v618, %v810
      %v843 = vpack.c.bf16 %v812, %v811
      %v844 = vpack.c.bf16 %v814, %v813
      %v845 = vpack.c.bf16 %v816, %v815
      %v846 = vpack.c.bf16 %v818, %v817
      %v847 = vpack.c.bf16 %v820, %v819
      %v848 = vpack.c.bf16 %v822, %v821
      %v849 = vpack.c.bf16 %v824, %v823
      %v850 = vpack.c.bf16 %v826, %v825
      %v851 = vpack.c.bf16 %v828, %v827
      %v852 = vpack.c.bf16 %v830, %v829
      %v853 = vpack.c.bf16 %v832, %v831
      %v854 = vpack.c.bf16 %v834, %v833
      %v855 = vpack.c.bf16 %v836, %v835
      %v856 = vpack.c.bf16 %v838, %v837
      %v857 = vpack.c.bf16 %v840, %v839
      %v858 = vpack.c.bf16 %v842, %v841
      %v859 = vld [vmem:[%s2] sm:$0xf]
      %v860 = vld [vmem:[%s2 + $0x4] sm:$0x7]
      %v861 = vld [vmem:[%s352] sm:$0xf]
      %v862 = vld [vmem:[%s352 + $0x4] sm:$0xf]
      %v863 = vld [vmem:[%s352 + $0x8] sm:$0xf]
      %v864 = vld [vmem:[%s352 + $0xc] sm:$0xf]
      %v865 = vld [vmem:[%s352 + $0x10] sm:$0xf]
      %v866 = vld [vmem:[%s352 + $0x14] sm:$0xf]
      %v867 = vld [vmem:[%s352 + $0x18] sm:$0xf]
      %v868 = vld [vmem:[%s352 + $0x1c] sm:$0xf]
      %v869 = vld [vmem:[%s352 + $0x20] sm:$0xf]
      %v870 = vld [vmem:[%s352 + $0x24] sm:$0xf]
      %v871 = vld [vmem:[%s352 + $0x28] sm:$0xf]
      %v872 = vld [vmem:[%s352 + $0x2c] sm:$0xf]
      %v873 = vld [vmem:[%s352 + $0x30] sm:$0xf]
      %v874 = vld [vmem:[%s352 + $0x34] sm:$0xf]
      %v875 = vld [vmem:[%s352 + $0x38] sm:$0xf]
      %v876 = vld [vmem:[%s352 + $0x3c] sm:$0xf]
      %v877 = vld [vmem:[%s352 + $0x40] sm:$0xf]
      %v878 = vld [vmem:[%s352 + $0x44] sm:$0xf]
      %v879 = vld [vmem:[%s352 + $0x48] sm:$0xf]
      %v880 = vld [vmem:[%s352 + $0x4c] sm:$0xf]
      %v881 = vld [vmem:[%s352 + $0x50] sm:$0xf]
      %v882 = vld [vmem:[%s352 + $0x54] sm:$0xf]
      %v883 = vld [vmem:[%s352 + $0x58] sm:$0xf]
      %v884 = vld [vmem:[%s352 + $0x5c] sm:$0xf]
      %v885 = vld [vmem:[%s352 + $0x60] sm:$0xf]
      %v886 = vld [vmem:[%s352 + $0x64] sm:$0xf]
      %v887 = vld [vmem:[%s352 + $0x68] sm:$0xf]
      %v888 = vld [vmem:[%s352 + $0x6c] sm:$0xf]
      %v889 = vld [vmem:[%s352 + $0x70] sm:$0xf]
      %v890 = vld [vmem:[%s352 + $0x74] sm:$0xf]
      %v891 = vld [vmem:[%s352 + $0x78] sm:$0xf]
      %v892 = vld [vmem:[%s352 + $0x7c] sm:$0xf]
      %v893 = vld [vmem:[%s3] sm:$0x1]
      %v926 = vunpack.c.l.b16 %v861
      %v927 = vunpack.c.l.b16 %v862
      %v928 = vunpack.c.l.b16 %v863
      %v929 = vunpack.c.l.b16 %v864
      %v930 = vunpack.c.l.b16 %v865
      %v931 = vunpack.c.l.b16 %v866
      %v932 = vunpack.c.l.b16 %v867
      %v933 = vunpack.c.l.b16 %v868
      %v934 = vunpack.c.l.b16 %v869
      %v935 = vunpack.c.l.b16 %v870
      %v936 = vunpack.c.l.b16 %v871
      %v937 = vunpack.c.l.b16 %v872
      %v938 = vunpack.c.l.b16 %v873
      %v939 = vunpack.c.l.b16 %v874
      %v940 = vunpack.c.l.b16 %v875
      %v941 = vunpack.c.l.b16 %v876
      %v942 = vunpack.c.l.b16 %v877
      %v943 = vunpack.c.l.b16 %v878
      %v944 = vunpack.c.l.b16 %v879
      %v945 = vunpack.c.l.b16 %v880
      %v946 = vunpack.c.l.b16 %v881
      %v947 = vunpack.c.l.b16 %v882
      %v948 = vunpack.c.l.b16 %v883
      %v949 = vunpack.c.l.b16 %v884
      %v950 = vunpack.c.l.b16 %v885
      %v951 = vunpack.c.l.b16 %v886
      %v952 = vunpack.c.l.b16 %v887
      %v953 = vunpack.c.l.b16 %v888
      %v954 = vunpack.c.l.b16 %v889
      %v955 = vunpack.c.l.b16 %v890
      %v956 = vunpack.c.l.b16 %v891
      %v957 = vunpack.c.l.b16 %v892
      %v958 = vpack.c.b16 %v927, %v926
      %v959 = vpack.c.b16 %v929, %v928
      %v960 = vpack.c.b16 %v931, %v930
      %v961 = vpack.c.b16 %v933, %v932
      %v962 = vpack.c.b16 %v935, %v934
      %v963 = vpack.c.b16 %v937, %v936
      %v964 = vpack.c.b16 %v939, %v938
      %v965 = vpack.c.b16 %v941, %v940
      %v966 = vpack.c.b16 %v943, %v942
      %v967 = vpack.c.b16 %v945, %v944
      %v968 = vpack.c.b16 %v947, %v946
      %v969 = vpack.c.b16 %v949, %v948
      %v970 = vpack.c.b16 %v951, %v950
      %v971 = vpack.c.b16 %v953, %v952
      %v972 = vpack.c.b16 %v955, %v954
      %v973 = vpack.c.b16 %v957, %v956
      %vm974 = vcmask 15360
      %v976 = vsel %vm974, %v958, 0
      %v979 = vsel %vm974, %v959, 0
      %v982 = vsel %vm974, %v960, 0
      %v985 = vsel %vm974, %v961, 0
      %v988 = vsel %vm974, %v962, 0
      %v991 = vsel %vm974, %v963, 0
      %v994 = vsel %vm974, %v964, 0
      %v997 = vsel %vm974, %v965, 0
      %v1000 = vsel %vm974, %v966, 0
      %v1003 = vsel %vm974, %v967, 0
      %v1006 = vsel %vm974, %v968, 0
      %v1009 = vsel %vm974, %v969, 0
      %v1012 = vsel %vm974, %v970, 0
      %v1015 = vsel %vm974, %v971, 0
      %v1018 = vsel %vm974, %v972, 0
      %v1021 = vsel %vm974, %v973, 0
      %vm1023 = vcmask 1040384
      %v1025 = vsel %vm1023, %v893, 0
      %1027 = vmatprep.subr.bf16.mxu0 0
      %1028 = vmatpush1.bf16.msra.mxu0 0
      %1029 = vmatprep.subr.bf16.mxu0 0
      %1030 = vmatpush1.bf16.msra.mxu0 0
      %1031 = vmatprep.subr.bf16.mxu0 0
      %1032 = vmatpush1.bf16.msra.mxu0 0
      %1033 = vmatprep.subr.bf16.mxu0 0
      %1034 = vmatpush1.bf16.msra.mxu0 0
      %1035 = vmatprep.subr.bf16.mxu0 0
      %1036 = vmatpush1.bf16.msra.mxu0 0
      %1037 = vmatprep.subr.bf16.mxu0 0
      %1038 = vmatpush1.bf16.msra.mxu0 0
      %1039 = vmatprep.subr.bf16.mxu0 0
      %1040 = vmatpush1.bf16.msra.mxu0 0
      %1041 = vmatprep.subr.bf16.mxu0 0
      %1042 = vmatpush1.bf16.msra.mxu0 %v1025
      %1043 = vmatprep.subr.bf16.mxu0 0
      %1044 = vmatpush2.bf16.msra.mxu0 0
      %1045 = vmatprep.subr.bf16.mxu0 0
      %1046 = vmatpush2.bf16.msra.mxu0 0
      %1047 = vmatprep.subr.bf16.mxu0 0
      %1048 = vmatpush2.bf16.msra.mxu0 0
      %1049 = vmatprep.subr.bf16.mxu0 0
      %1050 = vmatpush2.bf16.msra.mxu0 0
      %1051 = vmatprep.subr.bf16.mxu0 0
      %1052 = vmatpush2.bf16.msra.mxu0 0
      %1053 = vmatprep.subr.bf16.mxu0 0
      %1054 = vmatpush2.bf16.msra.mxu0 0
      %1055 = vmatprep.subr.bf16.mxu0 0
      %1056 = vmatpush2.bf16.msra.mxu0 0
      %1057 = vmatprep.subr.bf16.mxu0 0
      %1058 = vmatpush2.bf16.msra.mxu0 0
      %1059 = vmatprep.mubr.bf16.mxu0 0
      %1060 = vmatmul.mubr.bf16.gmra.mxu0 %v976
      %v1061 = vpop.f32.mrf.mxu0
      %v1062 = vadd.f32 0.0, %v1061
      %v1063 = vpop.f32.mrf.mxu0
      %v1064 = vpop.f32.mrf.mxu0
      %v1065 = vadd.f32 0.0, %v1064
      %v1066 = vpop.f32.mrf.mxu0
      %1067 = vmatprep.mubr.bf16.mxu0 0
      %1068 = vmatmul.mubr.bf16.gmra.mxu0 %v979
      %v1069 = vpop.f32.mrf.mxu0
      %v1070 = vadd.f32 0.0, %v1069
      %v1071 = vpop.f32.mrf.mxu0
      %v1072 = vpop.f32.mrf.mxu0
      %v1073 = vadd.f32 0.0, %v1072
      %v1074 = vpop.f32.mrf.mxu0
      %1075 = vmatprep.mubr.bf16.mxu0 0
      %1076 = vmatmul.mubr.bf16.gmra.mxu0 %v982
      %v1077 = vpop.f32.mrf.mxu0
      %v1078 = vadd.f32 0.0, %v1077
      %v1079 = vpop.f32.mrf.mxu0
      %v1080 = vpop.f32.mrf.mxu0
      %v1081 = vadd.f32 0.0, %v1080
      %v1082 = vpop.f32.mrf.mxu0
      %1083 = vmatprep.mubr.bf16.mxu0 0
      %1084 = vmatmul.mubr.bf16.gmra.mxu0 %v985
      %v1085 = vpop.f32.mrf.mxu0
      %v1086 = vadd.f32 0.0, %v1085
      %v1087 = vpop.f32.mrf.mxu0
      %v1088 = vpop.f32.mrf.mxu0
      %v1089 = vadd.f32 0.0, %v1088
      %v1090 = vpop.f32.mrf.mxu0
      %1091 = vmatprep.mubr.bf16.mxu0 0
      %1092 = vmatmul.mubr.bf16.gmra.mxu0 %v988
      %v1093 = vpop.f32.mrf.mxu0
      %v1094 = vadd.f32 0.0, %v1093
      %v1095 = vpop.f32.mrf.mxu0
      %v1096 = vpop.f32.mrf.mxu0
      %v1097 = vadd.f32 0.0, %v1096
      %v1098 = vpop.f32.mrf.mxu0
      %1099 = vmatprep.mubr.bf16.mxu0 0
      %1100 = vmatmul.mubr.bf16.gmra.mxu0 %v991
      %v1101 = vpop.f32.mrf.mxu0
      %v1102 = vadd.f32 0.0, %v1101
      %v1103 = vpop.f32.mrf.mxu0
      %v1104 = vpop.f32.mrf.mxu0
      %v1105 = vadd.f32 0.0, %v1104
      %v1106 = vpop.f32.mrf.mxu0
      %1107 = vmatprep.mubr.bf16.mxu0 0
      %1108 = vmatmul.mubr.bf16.gmra.mxu0 %v994
      %v1109 = vpop.f32.mrf.mxu0
      %v1110 = vadd.f32 0.0, %v1109
      %v1111 = vpop.f32.mrf.mxu0
      %v1112 = vpop.f32.mrf.mxu0
      %v1113 = vadd.f32 0.0, %v1112
      %v1114 = vpop.f32.mrf.mxu0
      %1115 = vmatprep.mubr.bf16.mxu0 0
      %1116 = vmatmul.mubr.bf16.gmra.mxu0 %v997
      %v1117 = vpop.f32.mrf.mxu0
      %v1118 = vadd.f32 0.0, %v1117
      %v1119 = vpop.f32.mrf.mxu0
      %v1120 = vpop.f32.mrf.mxu0
      %v1121 = vadd.f32 0.0, %v1120
      %v1122 = vpop.f32.mrf.mxu0
      %1123 = vmatprep.mubr.bf16.mxu0 0
      %1124 = vmatmul.mubr.bf16.gmra.mxu0 %v1000
      %v1125 = vpop.f32.mrf.mxu0
      %v1126 = vadd.f32 0.0, %v1125
      %v1127 = vpop.f32.mrf.mxu0
      %v1128 = vpop.f32.mrf.mxu0
      %v1129 = vadd.f32 0.0, %v1128
      %v1130 = vpop.f32.mrf.mxu0
      %1131 = vmatprep.mubr.bf16.mxu0 0
      %1132 = vmatmul.mubr.bf16.gmra.mxu0 %v1003
      %v1133 = vpop.f32.mrf.mxu0
      %v1134 = vadd.f32 0.0, %v1133
      %v1135 = vpop.f32.mrf.mxu0
      %v1136 = vpop.f32.mrf.mxu0
      %v1137 = vadd.f32 0.0, %v1136
      %v1138 = vpop.f32.mrf.mxu0
      %1139 = vmatprep.mubr.bf16.mxu0 0
      %1140 = vmatmul.mubr.bf16.gmra.mxu0 %v1006
      %v1141 = vpop.f32.mrf.mxu0
      %v1142 = vadd.f32 0.0, %v1141
      %v1143 = vpop.f32.mrf.mxu0
      %v1144 = vpop.f32.mrf.mxu0
      %v1145 = vadd.f32 0.0, %v1144
      %v1146 = vpop.f32.mrf.mxu0
      %1147 = vmatprep.mubr.bf16.mxu0 0
      %1148 = vmatmul.mubr.bf16.gmra.mxu0 %v1009
      %v1149 = vpop.f32.mrf.mxu0
      %v1150 = vadd.f32 0.0, %v1149
      %v1151 = vpop.f32.mrf.mxu0
      %v1152 = vpop.f32.mrf.mxu0
      %v1153 = vadd.f32 0.0, %v1152
      %v1154 = vpop.f32.mrf.mxu0
      %1155 = vmatprep.mubr.bf16.mxu0 0
      %1156 = vmatmul.mubr.bf16.gmra.mxu0 %v1012
      %v1157 = vpop.f32.mrf.mxu0
      %v1158 = vadd.f32 0.0, %v1157
      %v1159 = vpop.f32.mrf.mxu0
      %v1160 = vpop.f32.mrf.mxu0
      %v1161 = vadd.f32 0.0, %v1160
      %v1162 = vpop.f32.mrf.mxu0
      %1163 = vmatprep.mubr.bf16.mxu0 0
      %1164 = vmatmul.mubr.bf16.gmra.mxu0 %v1015
      %v1165 = vpop.f32.mrf.mxu0
      %v1166 = vadd.f32 0.0, %v1165
      %v1167 = vpop.f32.mrf.mxu0
      %v1168 = vpop.f32.mrf.mxu0
      %v1169 = vadd.f32 0.0, %v1168
      %v1170 = vpop.f32.mrf.mxu0
      %1171 = vmatprep.mubr.bf16.mxu0 0
      %1172 = vmatmul.mubr.bf16.gmra.mxu0 %v1018
      %v1173 = vpop.f32.mrf.mxu0
      %v1174 = vadd.f32 0.0, %v1173
      %v1175 = vpop.f32.mrf.mxu0
      %v1176 = vpop.f32.mrf.mxu0
      %v1177 = vadd.f32 0.0, %v1176
      %v1178 = vpop.f32.mrf.mxu0
      %1179 = vmatprep.mubr.bf16.mxu0 0
      %1180 = vmatmul.mubr.bf16.gmra.mxu0 %v1021
      %v1181 = vpop.f32.mrf.mxu0
      %v1182 = vadd.f32 0.0, %v1181
      %v1183 = vpop.f32.mrf.mxu0
      %v1184 = vpop.f32.mrf.mxu0
      %v1185 = vadd.f32 0.0, %v1184
      %v1186 = vpop.f32.mrf.mxu0
      %1187 = vdwg.mxu0
      %v1190 = vunpack.c.l.b16 %v859
      %v1191 = vunpack.c.l.b16 %v860
      %v1192 = vpack.c.b16 %v1191, %v1190
      %vm1193 = vcmask 113664
      %v1195 = vsel %vm1193, %v843, 0
      %v1198 = vsel %vm1193, %v844, 0
      %v1201 = vsel %vm1193, %v845, 0
      %v1204 = vsel %vm1193, %v846, 0
      %v1207 = vsel %vm1193, %v847, 0
      %v1210 = vsel %vm1193, %v848, 0
      %v1213 = vsel %vm1193, %v849, 0
      %v1216 = vsel %vm1193, %v850, 0
      %v1219 = vsel %vm1193, %v851, 0
      %v1222 = vsel %vm1193, %v852, 0
      %v1225 = vsel %vm1193, %v853, 0
      %v1228 = vsel %vm1193, %v854, 0
      %v1231 = vsel %vm1193, %v855, 0
      %v1234 = vsel %vm1193, %v856, 0
      %v1237 = vsel %vm1193, %v857, 0
      %v1240 = vsel %vm1193, %v858, 0
      %vm1242 = vcmask 1046528
      %v1244 = vsel %vm1242, %v1192, 0
      %1246 = vmatprep.subr.bf16.mxu0 0
      %1247 = vmatpush1.bf16.msra.mxu0 0
      %1248 = vmatprep.subr.bf16.mxu0 0
      %1249 = vmatpush1.bf16.msra.mxu0 0
      %1250 = vmatprep.subr.bf16.mxu0 0
      %1251 = vmatpush1.bf16.msra.mxu0 0
      %1252 = vmatprep.subr.bf16.mxu0 0
      %1253 = vmatpush1.bf16.msra.mxu0 0
      %1254 = vmatprep.subr.bf16.mxu0 0
      %1255 = vmatpush1.bf16.msra.mxu0 0
      %1256 = vmatprep.subr.bf16.mxu0 0
      %1257 = vmatpush1.bf16.msra.mxu0 0
      %1258 = vmatprep.subr.bf16.mxu0 0
      %1259 = vmatpush1.bf16.msra.mxu0 0
      %1260 = vmatprep.subr.bf16.mxu0 0
      %1261 = vmatpush1.bf16.msra.mxu0 %v1244
      %1262 = vmatprep.subr.bf16.mxu0 0
      %1263 = vmatpush2.bf16.msra.mxu0 0
      %1264 = vmatprep.subr.bf16.mxu0 0
      %1265 = vmatpush2.bf16.msra.mxu0 0
      %1266 = vmatprep.subr.bf16.mxu0 0
      %1267 = vmatpush2.bf16.msra.mxu0 0
      %1268 = vmatprep.subr.bf16.mxu0 0
      %1269 = vmatpush2.bf16.msra.mxu0 0
      %1270 = vmatprep.subr.bf16.mxu0 0
      %1271 = vmatpush2.bf16.msra.mxu0 0
      %1272 = vmatprep.subr.bf16.mxu0 0
      %1273 = vmatpush2.bf16.msra.mxu0 0
      %1274 = vmatprep.subr.bf16.mxu0 0
      %1275 = vmatpush2.bf16.msra.mxu0 0
      %1276 = vmatprep.subr.bf16.mxu0 0
      %1277 = vmatpush2.bf16.msra.mxu0 0
      %1278 = vmatprep.mubr.bf16.mxu0 0
      %1279 = vmatmul.mubr.bf16.gmra.mxu0 %v1195
      %v1280 = vpop.f32.mrf.mxu0
      %v1281 = vadd.f32 %v1062, %v1280
      %v1282 = vpop.f32.mrf.mxu0
      %v1283 = vpop.f32.mrf.mxu0
      %v1284 = vadd.f32 %v1065, %v1283
      %v1285 = vpop.f32.mrf.mxu0
      %1286 = vmatprep.mubr.bf16.mxu0 0
      %1287 = vmatmul.mubr.bf16.gmra.mxu0 %v1198
      %v1288 = vpop.f32.mrf.mxu0
      %v1289 = vadd.f32 %v1070, %v1288
      %v1290 = vpop.f32.mrf.mxu0
      %v1291 = vpop.f32.mrf.mxu0
      %v1292 = vadd.f32 %v1073, %v1291
      %v1293 = vpop.f32.mrf.mxu0
      %1294 = vmatprep.mubr.bf16.mxu0 0
      %1295 = vmatmul.mubr.bf16.gmra.mxu0 %v1201
      %v1296 = vpop.f32.mrf.mxu0
      %v1297 = vadd.f32 %v1078, %v1296
      %v1298 = vpop.f32.mrf.mxu0
      %v1299 = vpop.f32.mrf.mxu0
      %v1300 = vadd.f32 %v1081, %v1299
      %v1301 = vpop.f32.mrf.mxu0
      %1302 = vmatprep.mubr.bf16.mxu0 0
      %1303 = vmatmul.mubr.bf16.gmra.mxu0 %v1204
      %v1304 = vpop.f32.mrf.mxu0
      %v1305 = vadd.f32 %v1086, %v1304
      %v1306 = vpop.f32.mrf.mxu0
      %v1307 = vpop.f32.mrf.mxu0
      %v1308 = vadd.f32 %v1089, %v1307
      %v1309 = vpop.f32.mrf.mxu0
      %1310 = vmatprep.mubr.bf16.mxu0 0
      %1311 = vmatmul.mubr.bf16.gmra.mxu0 %v1207
      %v1312 = vpop.f32.mrf.mxu0
      %v1313 = vadd.f32 %v1094, %v1312
      %v1314 = vpop.f32.mrf.mxu0
      %v1315 = vpop.f32.mrf.mxu0
      %v1316 = vadd.f32 %v1097, %v1315
      %v1317 = vpop.f32.mrf.mxu0
      %1318 = vmatprep.mubr.bf16.mxu0 0
      %1319 = vmatmul.mubr.bf16.gmra.mxu0 %v1210
      %v1320 = vpop.f32.mrf.mxu0
      %v1321 = vadd.f32 %v1102, %v1320
      %v1322 = vpop.f32.mrf.mxu0
      %v1323 = vpop.f32.mrf.mxu0
      %v1324 = vadd.f32 %v1105, %v1323
      %v1325 = vpop.f32.mrf.mxu0
      %1326 = vmatprep.mubr.bf16.mxu0 0
      %1327 = vmatmul.mubr.bf16.gmra.mxu0 %v1213
      %v1328 = vpop.f32.mrf.mxu0
      %v1329 = vadd.f32 %v1110, %v1328
      %v1330 = vpop.f32.mrf.mxu0
      %v1331 = vpop.f32.mrf.mxu0
      %v1332 = vadd.f32 %v1113, %v1331
      %v1333 = vpop.f32.mrf.mxu0
      %1334 = vmatprep.mubr.bf16.mxu0 0
      %1335 = vmatmul.mubr.bf16.gmra.mxu0 %v1216
      %v1336 = vpop.f32.mrf.mxu0
      %v1337 = vadd.f32 %v1118, %v1336
      %v1338 = vpop.f32.mrf.mxu0
      %v1339 = vpop.f32.mrf.mxu0
      %v1340 = vadd.f32 %v1121, %v1339
      %v1341 = vpop.f32.mrf.mxu0
      %1342 = vmatprep.mubr.bf16.mxu0 0
      %1343 = vmatmul.mubr.bf16.gmra.mxu0 %v1219
      %v1344 = vpop.f32.mrf.mxu0
      %v1345 = vadd.f32 %v1126, %v1344
      %v1346 = vpop.f32.mrf.mxu0
      %v1347 = vpop.f32.mrf.mxu0
      %v1348 = vadd.f32 %v1129, %v1347
      %v1349 = vpop.f32.mrf.mxu0
      %1350 = vmatprep.mubr.bf16.mxu0 0
      %1351 = vmatmul.mubr.bf16.gmra.mxu0 %v1222
      %v1352 = vpop.f32.mrf.mxu0
      %v1353 = vadd.f32 %v1134, %v1352
      %v1354 = vpop.f32.mrf.mxu0
      %v1355 = vpop.f32.mrf.mxu0
      %v1356 = vadd.f32 %v1137, %v1355
      %v1357 = vpop.f32.mrf.mxu0
      %1358 = vmatprep.mubr.bf16.mxu0 0
      %1359 = vmatmul.mubr.bf16.gmra.mxu0 %v1225
      %v1360 = vpop.f32.mrf.mxu0
      %v1361 = vadd.f32 %v1142, %v1360
      %v1362 = vpop.f32.mrf.mxu0
      %v1363 = vpop.f32.mrf.mxu0
      %v1364 = vadd.f32 %v1145, %v1363
      %v1365 = vpop.f32.mrf.mxu0
      %1366 = vmatprep.mubr.bf16.mxu0 0
      %1367 = vmatmul.mubr.bf16.gmra.mxu0 %v1228
      %v1368 = vpop.f32.mrf.mxu0
      %v1369 = vadd.f32 %v1150, %v1368
      %v1370 = vpop.f32.mrf.mxu0
      %v1371 = vpop.f32.mrf.mxu0
      %v1372 = vadd.f32 %v1153, %v1371
      %v1373 = vpop.f32.mrf.mxu0
      %1374 = vmatprep.mubr.bf16.mxu0 0
      %1375 = vmatmul.mubr.bf16.gmra.mxu0 %v1231
      %v1376 = vpop.f32.mrf.mxu0
      %v1377 = vadd.f32 %v1158, %v1376
      %v1378 = vpop.f32.mrf.mxu0
      %v1379 = vpop.f32.mrf.mxu0
      %v1380 = vadd.f32 %v1161, %v1379
      %v1381 = vpop.f32.mrf.mxu0
      %1382 = vmatprep.mubr.bf16.mxu0 0
      %1383 = vmatmul.mubr.bf16.gmra.mxu0 %v1234
      %v1384 = vpop.f32.mrf.mxu0
      %v1385 = vadd.f32 %v1166, %v1384
      %v1386 = vpop.f32.mrf.mxu0
      %v1387 = vpop.f32.mrf.mxu0
      %v1388 = vadd.f32 %v1169, %v1387
      %v1389 = vpop.f32.mrf.mxu0
      %1390 = vmatprep.mubr.bf16.mxu0 0
      %1391 = vmatmul.mubr.bf16.gmra.mxu0 %v1237
      %v1392 = vpop.f32.mrf.mxu0
      %v1393 = vadd.f32 %v1174, %v1392
      %v1394 = vpop.f32.mrf.mxu0
      %v1395 = vpop.f32.mrf.mxu0
      %v1396 = vadd.f32 %v1177, %v1395
      %v1397 = vpop.f32.mrf.mxu0
      %1398 = vmatprep.mubr.bf16.mxu0 0
      %1399 = vmatmul.mubr.bf16.gmra.mxu0 %v1240
      %v1400 = vpop.f32.mrf.mxu0
      %v1401 = vadd.f32 %v1182, %v1400
      %v1402 = vpop.f32.mrf.mxu0
      %v1403 = vpop.f32.mrf.mxu0
      %v1404 = vadd.f32 %v1185, %v1403
      %v1405 = vpop.f32.mrf.mxu0
      %1406 = vdwg.mxu0
      %v1407 = vld [vmem:[%s4] sm:$0x1]
      %v1409 = vlaneseq
      %v1410 = vshrl.u32 %v1409, 7
      %v1411 = vsub.s32 0, %v1410
      %v1412 = vrot.slane %v1407, %v1411
      %v1414 = vadd.f32 %v1281, %v1412
      %v1415 = vadd.f32 %v1284, %v1412
      %v1416 = vadd.f32 %v1289, %v1412
      %v1417 = vadd.f32 %v1292, %v1412
      %v1418 = vadd.f32 %v1297, %v1412
      %v1419 = vadd.f32 %v1300, %v1412
      %v1420 = vadd.f32 %v1305, %v1412
      %v1421 = vadd.f32 %v1308, %v1412
      %v1422 = vadd.f32 %v1313, %v1412
      %v1423 = vadd.f32 %v1316, %v1412
      %v1424 = vadd.f32 %v1321, %v1412
      %v1425 = vadd.f32 %v1324, %v1412
      %v1426 = vadd.f32 %v1329, %v1412
      %v1427 = vadd.f32 %v1332, %v1412
      %v1428 = vadd.f32 %v1337, %v1412
      %v1429 = vadd.f32 %v1340, %v1412
      %v1430 = vadd.f32 %v1345, %v1412
      %v1431 = vadd.f32 %v1348, %v1412
      %v1432 = vadd.f32 %v1353, %v1412
      %v1433 = vadd.f32 %v1356, %v1412
      %v1434 = vadd.f32 %v1361, %v1412
      %v1435 = vadd.f32 %v1364, %v1412
      %v1436 = vadd.f32 %v1369, %v1412
      %v1437 = vadd.f32 %v1372, %v1412
      %v1438 = vadd.f32 %v1377, %v1412
      %v1439 = vadd.f32 %v1380, %v1412
      %v1440 = vadd.f32 %v1385, %v1412
      %v1441 = vadd.f32 %v1388, %v1412
      %v1442 = vadd.f32 %v1393, %v1412
      %v1443 = vadd.f32 %v1396, %v1412
      %v1444 = vadd.f32 %v1401, %v1412
      %v1445 = vadd.f32 %v1404, %v1412
      %v1446 = vmax.f32 %v1414, 0.0
      %v1447 = vmax.f32 %v1415, 0.0
      %v1448 = vmax.f32 %v1416, 0.0
      %v1449 = vmax.f32 %v1417, 0.0
      %v1450 = vmax.f32 %v1418, 0.0
      %v1451 = vmax.f32 %v1419, 0.0
      %v1452 = vmax.f32 %v1420, 0.0
      %v1453 = vmax.f32 %v1421, 0.0
      %v1454 = vmax.f32 %v1422, 0.0
      %v1455 = vmax.f32 %v1423, 0.0
      %v1456 = vmax.f32 %v1424, 0.0
      %v1457 = vmax.f32 %v1425, 0.0
      %v1458 = vmax.f32 %v1426, 0.0
      %v1459 = vmax.f32 %v1427, 0.0
      %v1460 = vmax.f32 %v1428, 0.0
      %v1461 = vmax.f32 %v1429, 0.0
      %v1462 = vmax.f32 %v1430, 0.0
      %v1463 = vmax.f32 %v1431, 0.0
      %v1464 = vmax.f32 %v1432, 0.0
      %v1465 = vmax.f32 %v1433, 0.0
      %v1466 = vmax.f32 %v1434, 0.0
      %v1467 = vmax.f32 %v1435, 0.0
      %v1468 = vmax.f32 %v1436, 0.0
      %v1469 = vmax.f32 %v1437, 0.0
      %v1470 = vmax.f32 %v1438, 0.0
      %v1471 = vmax.f32 %v1439, 0.0
      %v1472 = vmax.f32 %v1440, 0.0
      %v1473 = vmax.f32 %v1441, 0.0
      %v1474 = vmax.f32 %v1442, 0.0
      %v1475 = vmax.f32 %v1443, 0.0
      %v1476 = vmax.f32 %v1444, 0.0
      %v1477 = vmax.f32 %v1445, 0.0
      %v1478 = vpack.c.bf16 %v1447, %v1446
      %v1479 = vpack.c.bf16 %v1449, %v1448
      %v1480 = vpack.c.bf16 %v1451, %v1450
      %v1481 = vpack.c.bf16 %v1453, %v1452
      %v1482 = vpack.c.bf16 %v1455, %v1454
      %v1483 = vpack.c.bf16 %v1457, %v1456
      %v1484 = vpack.c.bf16 %v1459, %v1458
      %v1485 = vpack.c.bf16 %v1461, %v1460
      %v1486 = vpack.c.bf16 %v1463, %v1462
      %v1487 = vpack.c.bf16 %v1465, %v1464
      %v1488 = vpack.c.bf16 %v1467, %v1466
      %v1489 = vpack.c.bf16 %v1469, %v1468
      %v1490 = vpack.c.bf16 %v1471, %v1470
      %v1491 = vpack.c.bf16 %v1473, %v1472
      %v1492 = vpack.c.bf16 %v1475, %v1474
      %v1493 = vpack.c.bf16 %v1477, %v1476
      %v1494 = vld [vmem:[%s5] sm:$0xf]
      %v1495 = vld [vmem:[%s5 + $0x4] sm:$0xf]
      %v1496 = vld [vmem:[%s5 + $0x8] sm:$0xf]
      %v1497 = vld [vmem:[%s5 + $0xc] sm:$0xf]
      %v1498 = vld [vmem:[%s6] sm:$0x1]
      %v1500 = vlaneseq
      %v1501 = vshrl.u32 %v1500, 7
      %v1502 = vsub.s32 0, %v1501
      %v1503 = vrot.slane %v1498, %v1502
      %v1509 = vunpack.c.l.b16 %v1494
      %v1510 = vunpack.c.l.b16 %v1495
      %v1511 = vunpack.c.l.b16 %v1496
      %v1512 = vunpack.c.l.b16 %v1497
      %v1513 = vpack.c.b16 %v1510, %v1509
      %v1514 = vpack.c.b16 %v1512, %v1511
      %vm1517 = vcmask 261120
      %v1519 = vsel %vm1517, %v1478, 0
      %v1522 = vsel %vm1517, %v1479, 0
      %v1525 = vsel %vm1517, %v1480, 0
      %v1528 = vsel %vm1517, %v1481, 0
      %v1531 = vsel %vm1517, %v1482, 0
      %v1534 = vsel %vm1517, %v1483, 0
      %v1537 = vsel %vm1517, %v1484, 0
      %v1540 = vsel %vm1517, %v1485, 0
      %v1543 = vsel %vm1517, %v1486, 0
      %v1546 = vsel %vm1517, %v1487, 0
      %v1549 = vsel %vm1517, %v1488, 0
      %v1552 = vsel %vm1517, %v1489, 0
      %v1555 = vsel %vm1517, %v1490, 0
      %v1558 = vsel %vm1517, %v1491, 0
      %v1561 = vsel %vm1517, %v1492, 0
      %v1564 = vsel %vm1517, %v1493, 0
      %1566 = vmatprep.subr.bf16.mxu0 0
      %1567 = vmatpush1.bf16.msra.mxu0 0
      %1568 = vmatprep.subr.bf16.mxu0 0
      %1569 = vmatpush1.bf16.msra.mxu0 0
      %1570 = vmatprep.subr.bf16.mxu0 0
      %1571 = vmatpush1.bf16.msra.mxu0 0
      %1572 = vmatprep.subr.bf16.mxu0 0
      %1573 = vmatpush1.bf16.msra.mxu0 0
      %1574 = vmatprep.subr.bf16.mxu0 0
      %1575 = vmatpush1.bf16.msra.mxu0 0
      %1576 = vmatprep.subr.bf16.mxu0 0
      %1577 = vmatpush1.bf16.msra.mxu0 0
      %1578 = vmatprep.subr.bf16.mxu0 0
      %1579 = vmatpush1.bf16.msra.mxu0 %v1514
      %1580 = vmatprep.subr.bf16.mxu0 0
      %1581 = vmatpush1.bf16.msra.mxu0 %v1513
      %1582 = vmatprep.subr.bf16.mxu0 0
      %1583 = vmatpush2.bf16.msra.mxu0 0
      %1584 = vmatprep.subr.bf16.mxu0 0
      %1585 = vmatpush2.bf16.msra.mxu0 0
      %1586 = vmatprep.subr.bf16.mxu0 0
      %1587 = vmatpush2.bf16.msra.mxu0 0
      %1588 = vmatprep.subr.bf16.mxu0 0
      %1589 = vmatpush2.bf16.msra.mxu0 0
      %1590 = vmatprep.subr.bf16.mxu0 0
      %1591 = vmatpush2.bf16.msra.mxu0 0
      %1592 = vmatprep.subr.bf16.mxu0 0
      %1593 = vmatpush2.bf16.msra.mxu0 0
      %1594 = vmatprep.subr.bf16.mxu0 0
      %1595 = vmatpush2.bf16.msra.mxu0 0
      %1596 = vmatprep.subr.bf16.mxu0 0
      %1597 = vmatpush2.bf16.msra.mxu0 0
      %1598 = vmatprep.mubr.bf16.mxu0 0
      %1599 = vmatmul.mubr.bf16.gmra.mxu0 %v1519
      %v1600 = vpop.f32.mrf.mxu0
      %v1601 = vadd.f32 %v1503, %v1600
      %v1602 = vpop.f32.mrf.mxu0
      %v1603 = vpop.f32.mrf.mxu0
      %v1604 = vadd.f32 %v1503, %v1603
      %v1605 = vpop.f32.mrf.mxu0
      %1606 = vmatprep.mubr.bf16.mxu0 0
      %1607 = vmatmul.mubr.bf16.gmra.mxu0 %v1522
      %v1608 = vpop.f32.mrf.mxu0
      %v1609 = vadd.f32 %v1503, %v1608
      %v1610 = vpop.f32.mrf.mxu0
      %v1611 = vpop.f32.mrf.mxu0
      %v1612 = vadd.f32 %v1503, %v1611
      %v1613 = vpop.f32.mrf.mxu0
      %1614 = vmatprep.mubr.bf16.mxu0 0
      %1615 = vmatmul.mubr.bf16.gmra.mxu0 %v1525
      %v1616 = vpop.f32.mrf.mxu0
      %v1617 = vadd.f32 %v1503, %v1616
      %v1618 = vpop.f32.mrf.mxu0
      %v1619 = vpop.f32.mrf.mxu0
      %v1620 = vadd.f32 %v1503, %v1619
      %v1621 = vpop.f32.mrf.mxu0
      %1622 = vmatprep.mubr.bf16.mxu0 0
      %1623 = vmatmul.mubr.bf16.gmra.mxu0 %v1528
      %v1624 = vpop.f32.mrf.mxu0
      %v1625 = vadd.f32 %v1503, %v1624
      %v1626 = vpop.f32.mrf.mxu0
      %v1627 = vpop.f32.mrf.mxu0
      %v1628 = vadd.f32 %v1503, %v1627
      %v1629 = vpop.f32.mrf.mxu0
      %1630 = vmatprep.mubr.bf16.mxu0 0
      %1631 = vmatmul.mubr.bf16.gmra.mxu0 %v1531
      %v1632 = vpop.f32.mrf.mxu0
      %v1633 = vadd.f32 %v1503, %v1632
      %v1634 = vpop.f32.mrf.mxu0
      %v1635 = vpop.f32.mrf.mxu0
      %v1636 = vadd.f32 %v1503, %v1635
      %v1637 = vpop.f32.mrf.mxu0
      %1638 = vmatprep.mubr.bf16.mxu0 0
      %1639 = vmatmul.mubr.bf16.gmra.mxu0 %v1534
      %v1640 = vpop.f32.mrf.mxu0
      %v1641 = vadd.f32 %v1503, %v1640
      %v1642 = vpop.f32.mrf.mxu0
      %v1643 = vpop.f32.mrf.mxu0
      %v1644 = vadd.f32 %v1503, %v1643
      %v1645 = vpop.f32.mrf.mxu0
      %1646 = vmatprep.mubr.bf16.mxu0 0
      %1647 = vmatmul.mubr.bf16.gmra.mxu0 %v1537
      %v1648 = vpop.f32.mrf.mxu0
      %v1649 = vadd.f32 %v1503, %v1648
      %v1650 = vpop.f32.mrf.mxu0
      %v1651 = vpop.f32.mrf.mxu0
      %v1652 = vadd.f32 %v1503, %v1651
      %v1653 = vpop.f32.mrf.mxu0
      %1654 = vmatprep.mubr.bf16.mxu0 0
      %1655 = vmatmul.mubr.bf16.gmra.mxu0 %v1540
      %v1656 = vpop.f32.mrf.mxu0
      %v1657 = vadd.f32 %v1503, %v1656
      %v1658 = vpop.f32.mrf.mxu0
      %v1659 = vpop.f32.mrf.mxu0
      %v1660 = vadd.f32 %v1503, %v1659
      %v1661 = vpop.f32.mrf.mxu0
      %1662 = vmatprep.mubr.bf16.mxu0 0
      %1663 = vmatmul.mubr.bf16.gmra.mxu0 %v1543
      %v1664 = vpop.f32.mrf.mxu0
      %v1665 = vadd.f32 %v1503, %v1664
      %v1666 = vpop.f32.mrf.mxu0
      %v1667 = vpop.f32.mrf.mxu0
      %v1668 = vadd.f32 %v1503, %v1667
      %v1669 = vpop.f32.mrf.mxu0
      %1670 = vmatprep.mubr.bf16.mxu0 0
      %1671 = vmatmul.mubr.bf16.gmra.mxu0 %v1546
      %v1672 = vpop.f32.mrf.mxu0
      %v1673 = vadd.f32 %v1503, %v1672
      %v1674 = vpop.f32.mrf.mxu0
      %v1675 = vpop.f32.mrf.mxu0
      %v1676 = vadd.f32 %v1503, %v1675
      %v1677 = vpop.f32.mrf.mxu0
      %1678 = vmatprep.mubr.bf16.mxu0 0
      %1679 = vmatmul.mubr.bf16.gmra.mxu0 %v1549
      %v1680 = vpop.f32.mrf.mxu0
      %v1681 = vadd.f32 %v1503, %v1680
      %v1682 = vpop.f32.mrf.mxu0
      %v1683 = vpop.f32.mrf.mxu0
      %v1684 = vadd.f32 %v1503, %v1683
      %v1685 = vpop.f32.mrf.mxu0
      %1686 = vmatprep.mubr.bf16.mxu0 0
      %1687 = vmatmul.mubr.bf16.gmra.mxu0 %v1552
      %v1688 = vpop.f32.mrf.mxu0
      %v1689 = vadd.f32 %v1503, %v1688
      %v1690 = vpop.f32.mrf.mxu0
      %v1691 = vpop.f32.mrf.mxu0
      %v1692 = vadd.f32 %v1503, %v1691
      %v1693 = vpop.f32.mrf.mxu0
      %1694 = vmatprep.mubr.bf16.mxu0 0
      %1695 = vmatmul.mubr.bf16.gmra.mxu0 %v1555
      %v1696 = vpop.f32.mrf.mxu0
      %v1697 = vadd.f32 %v1503, %v1696
      %v1698 = vpop.f32.mrf.mxu0
      %v1699 = vpop.f32.mrf.mxu0
      %v1700 = vadd.f32 %v1503, %v1699
      %v1701 = vpop.f32.mrf.mxu0
      %1702 = vmatprep.mubr.bf16.mxu0 0
      %1703 = vmatmul.mubr.bf16.gmra.mxu0 %v1558
      %v1704 = vpop.f32.mrf.mxu0
      %v1705 = vadd.f32 %v1503, %v1704
      %v1706 = vpop.f32.mrf.mxu0
      %v1707 = vpop.f32.mrf.mxu0
      %v1708 = vadd.f32 %v1503, %v1707
      %v1709 = vpop.f32.mrf.mxu0
      %1710 = vmatprep.mubr.bf16.mxu0 0
      %1711 = vmatmul.mubr.bf16.gmra.mxu0 %v1561
      %v1712 = vpop.f32.mrf.mxu0
      %v1713 = vadd.f32 %v1503, %v1712
      %v1714 = vpop.f32.mrf.mxu0
      %v1715 = vpop.f32.mrf.mxu0
      %v1716 = vadd.f32 %v1503, %v1715
      %v1717 = vpop.f32.mrf.mxu0
      %1718 = vmatprep.mubr.bf16.mxu0 0
      %1719 = vmatmul.mubr.bf16.gmra.mxu0 %v1564
      %v1720 = vpop.f32.mrf.mxu0
      %v1721 = vadd.f32 %v1503, %v1720
      %v1722 = vpop.f32.mrf.mxu0
      %v1723 = vpop.f32.mrf.mxu0
      %v1724 = vadd.f32 %v1503, %v1723
      %v1725 = vpop.f32.mrf.mxu0
      %1726 = vdwg.mxu0
      %v1727 = vmax.f32 %v1601, 0.0
      %v1728 = vmax.f32 %v1604, 0.0
      %v1729 = vmax.f32 %v1609, 0.0
      %v1730 = vmax.f32 %v1612, 0.0
      %v1731 = vmax.f32 %v1617, 0.0
      %v1732 = vmax.f32 %v1620, 0.0
      %v1733 = vmax.f32 %v1625, 0.0
      %v1734 = vmax.f32 %v1628, 0.0
      %v1735 = vmax.f32 %v1633, 0.0
      %v1736 = vmax.f32 %v1636, 0.0
      %v1737 = vmax.f32 %v1641, 0.0
      %v1738 = vmax.f32 %v1644, 0.0
      %v1739 = vmax.f32 %v1649, 0.0
      %v1740 = vmax.f32 %v1652, 0.0
      %v1741 = vmax.f32 %v1657, 0.0
      %v1742 = vmax.f32 %v1660, 0.0
      %v1743 = vmax.f32 %v1665, 0.0
      %v1744 = vmax.f32 %v1668, 0.0
      %v1745 = vmax.f32 %v1673, 0.0
      %v1746 = vmax.f32 %v1676, 0.0
      %v1747 = vmax.f32 %v1681, 0.0
      %v1748 = vmax.f32 %v1684, 0.0
      %v1749 = vmax.f32 %v1689, 0.0
      %v1750 = vmax.f32 %v1692, 0.0
      %v1751 = vmax.f32 %v1697, 0.0
      %v1752 = vmax.f32 %v1700, 0.0
      %v1753 = vmax.f32 %v1705, 0.0
      %v1754 = vmax.f32 %v1708, 0.0
      %v1755 = vmax.f32 %v1713, 0.0
      %v1756 = vmax.f32 %v1716, 0.0
      %v1757 = vmax.f32 %v1721, 0.0
      %v1758 = vmax.f32 %v1724, 0.0
      %v1759 = vpack.c.bf16 %v1728, %v1727
      %v1760 = vpack.c.bf16 %v1730, %v1729
      %v1761 = vpack.c.bf16 %v1732, %v1731
      %v1762 = vpack.c.bf16 %v1734, %v1733
      %v1763 = vpack.c.bf16 %v1736, %v1735
      %v1764 = vpack.c.bf16 %v1738, %v1737
      %v1765 = vpack.c.bf16 %v1740, %v1739
      %v1766 = vpack.c.bf16 %v1742, %v1741
      %v1767 = vpack.c.bf16 %v1744, %v1743
      %v1768 = vpack.c.bf16 %v1746, %v1745
      %v1769 = vpack.c.bf16 %v1748, %v1747
      %v1770 = vpack.c.bf16 %v1750, %v1749
      %v1771 = vpack.c.bf16 %v1752, %v1751
      %v1772 = vpack.c.bf16 %v1754, %v1753
      %v1773 = vpack.c.bf16 %v1756, %v1755
      %v1774 = vpack.c.bf16 %v1758, %v1757
      %v1775 = vld [vmem:[%s7] sm:$0xf]
      %v1776 = vld [vmem:[%s7 + $0x4] sm:$0xf]
      %v1777 = vld [vmem:[#allocation2] sm:$0x1]
      %v1779 = vlaneseq
      %v1780 = vshrl.u32 %v1779, 7
      %v1781 = vsub.s32 0, %v1780
      %v1782 = vrot.slane %v1777, %v1781
      %v1786 = vunpack.c.l.b16 %v1775
      %v1787 = vunpack.c.l.b16 %v1776
      %v1788 = vpack.c.b16 %v1787, %v1786
      %vm1790 = vcmask 130048
      %v1792 = vsel %vm1790, %v1759, 0
      %v1795 = vsel %vm1790, %v1760, 0
      %v1798 = vsel %vm1790, %v1761, 0
      %v1801 = vsel %vm1790, %v1762, 0
      %v1804 = vsel %vm1790, %v1763, 0
      %v1807 = vsel %vm1790, %v1764, 0
      %v1810 = vsel %vm1790, %v1765, 0
      %v1813 = vsel %vm1790, %v1766, 0
      %v1816 = vsel %vm1790, %v1767, 0
      %v1819 = vsel %vm1790, %v1768, 0
      %v1822 = vsel %vm1790, %v1769, 0
      %v1825 = vsel %vm1790, %v1770, 0
      %v1828 = vsel %vm1790, %v1771, 0
      %v1831 = vsel %vm1790, %v1772, 0
      %v1834 = vsel %vm1790, %v1773, 0
      %v1837 = vsel %vm1790, %v1774, 0
      %1839 = vmatprep.subr.bf16.mxu0 0
      %1840 = vmatpush1.bf16.msra.mxu0 0
      %1841 = vmatprep.subr.bf16.mxu0 0
      %1842 = vmatpush1.bf16.msra.mxu0 0
      %1843 = vmatprep.subr.bf16.mxu0 0
      %1844 = vmatpush1.bf16.msra.mxu0 0
      %1845 = vmatprep.subr.bf16.mxu0 0
      %1846 = vmatpush1.bf16.msra.mxu0 0
      %1847 = vmatprep.subr.bf16.mxu0 0
      %1848 = vmatpush1.bf16.msra.mxu0 0
      %1849 = vmatprep.subr.bf16.mxu0 0
      %1850 = vmatpush1.bf16.msra.mxu0 0
      %1851 = vmatprep.subr.bf16.mxu0 0
      %1852 = vmatpush1.bf16.msra.mxu0 0
      %1853 = vmatprep.subr.bf16.mxu0 0
      %1854 = vmatpush1.bf16.msra.mxu0 %v1788
      %1855 = vmatprep.subr.bf16.mxu0 0
      %1856 = vmatpush2.bf16.msra.mxu0 0
      %1857 = vmatprep.subr.bf16.mxu0 0
      %1858 = vmatpush2.bf16.msra.mxu0 0
      %1859 = vmatprep.subr.bf16.mxu0 0
      %1860 = vmatpush2.bf16.msra.mxu0 0
      %1861 = vmatprep.subr.bf16.mxu0 0
      %1862 = vmatpush2.bf16.msra.mxu0 0
      %1863 = vmatprep.subr.bf16.mxu0 0
      %1864 = vmatpush2.bf16.msra.mxu0 0
      %1865 = vmatprep.subr.bf16.mxu0 0
      %1866 = vmatpush2.bf16.msra.mxu0 0
      %1867 = vmatprep.subr.bf16.mxu0 0
      %1868 = vmatpush2.bf16.msra.mxu0 0
      %1869 = vmatprep.subr.bf16.mxu0 0
      %1870 = vmatpush2.bf16.msra.mxu0 0
      %1871 = vmatprep.mubr.bf16.mxu0 0
      %1872 = vmatmul.mubr.bf16.gmra.mxu0 %v1792
      %v1873 = vpop.f32.mrf.mxu0
      %v1874 = vadd.f32 %v1782, %v1873
      %v1875 = vpop.f32.mrf.mxu0
      %v1876 = vpop.f32.mrf.mxu0
      %v1877 = vadd.f32 %v1782, %v1876
      %v1878 = vpop.f32.mrf.mxu0
      %1879 = vmatprep.mubr.bf16.mxu0 0
      %1880 = vmatmul.mubr.bf16.gmra.mxu0 %v1795
      %v1881 = vpop.f32.mrf.mxu0
      %v1882 = vadd.f32 %v1782, %v1881
      %v1883 = vpop.f32.mrf.mxu0
      %v1884 = vpop.f32.mrf.mxu0
      %v1885 = vadd.f32 %v1782, %v1884
      %v1886 = vpop.f32.mrf.mxu0
      %1887 = vmatprep.mubr.bf16.mxu0 0
      %1888 = vmatmul.mubr.bf16.gmra.mxu0 %v1798
      %v1889 = vpop.f32.mrf.mxu0
      %v1890 = vadd.f32 %v1782, %v1889
      %v1891 = vpop.f32.mrf.mxu0
      %v1892 = vpop.f32.mrf.mxu0
      %v1893 = vadd.f32 %v1782, %v1892
      %v1894 = vpop.f32.mrf.mxu0
      %1895 = vmatprep.mubr.bf16.mxu0 0
      %1896 = vmatmul.mubr.bf16.gmra.mxu0 %v1801
      %v1897 = vpop.f32.mrf.mxu0
      %v1898 = vadd.f32 %v1782, %v1897
      %v1899 = vpop.f32.mrf.mxu0
      %v1900 = vpop.f32.mrf.mxu0
      %v1901 = vadd.f32 %v1782, %v1900
      %v1902 = vpop.f32.mrf.mxu0
      %1903 = vmatprep.mubr.bf16.mxu0 0
      %1904 = vmatmul.mubr.bf16.gmra.mxu0 %v1804
      %v1905 = vpop.f32.mrf.mxu0
      %v1906 = vadd.f32 %v1782, %v1905
      %v1907 = vpop.f32.mrf.mxu0
      %v1908 = vpop.f32.mrf.mxu0
      %v1909 = vadd.f32 %v1782, %v1908
      %v1910 = vpop.f32.mrf.mxu0
      %1911 = vmatprep.mubr.bf16.mxu0 0
      %1912 = vmatmul.mubr.bf16.gmra.mxu0 %v1807
      %v1913 = vpop.f32.mrf.mxu0
      %v1914 = vadd.f32 %v1782, %v1913
      %v1915 = vpop.f32.mrf.mxu0
      %v1916 = vpop.f32.mrf.mxu0
      %v1917 = vadd.f32 %v1782, %v1916
      %v1918 = vpop.f32.mrf.mxu0
      %1919 = vmatprep.mubr.bf16.mxu0 0
      %1920 = vmatmul.mubr.bf16.gmra.mxu0 %v1810
      %v1921 = vpop.f32.mrf.mxu0
      %v1922 = vadd.f32 %v1782, %v1921
      %v1923 = vpop.f32.mrf.mxu0
      %v1924 = vpop.f32.mrf.mxu0
      %v1925 = vadd.f32 %v1782, %v1924
      %v1926 = vpop.f32.mrf.mxu0
      %1927 = vmatprep.mubr.bf16.mxu0 0
      %1928 = vmatmul.mubr.bf16.gmra.mxu0 %v1813
      %v1929 = vpop.f32.mrf.mxu0
      %v1930 = vadd.f32 %v1782, %v1929
      %v1931 = vpop.f32.mrf.mxu0
      %v1932 = vpop.f32.mrf.mxu0
      %v1933 = vadd.f32 %v1782, %v1932
      %v1934 = vpop.f32.mrf.mxu0
      %1935 = vmatprep.mubr.bf16.mxu0 0
      %1936 = vmatmul.mubr.bf16.gmra.mxu0 %v1816
      %v1937 = vpop.f32.mrf.mxu0
      %v1938 = vadd.f32 %v1782, %v1937
      %v1939 = vpop.f32.mrf.mxu0
      %v1940 = vpop.f32.mrf.mxu0
      %v1941 = vadd.f32 %v1782, %v1940
      %v1942 = vpop.f32.mrf.mxu0
      %1943 = vmatprep.mubr.bf16.mxu0 0
      %1944 = vmatmul.mubr.bf16.gmra.mxu0 %v1819
      %v1945 = vpop.f32.mrf.mxu0
      %v1946 = vadd.f32 %v1782, %v1945
      %v1947 = vpop.f32.mrf.mxu0
      %v1948 = vpop.f32.mrf.mxu0
      %v1949 = vadd.f32 %v1782, %v1948
      %v1950 = vpop.f32.mrf.mxu0
      %1951 = vmatprep.mubr.bf16.mxu0 0
      %1952 = vmatmul.mubr.bf16.gmra.mxu0 %v1822
      %v1953 = vpop.f32.mrf.mxu0
      %v1954 = vadd.f32 %v1782, %v1953
      %v1955 = vpop.f32.mrf.mxu0
      %v1956 = vpop.f32.mrf.mxu0
      %v1957 = vadd.f32 %v1782, %v1956
      %v1958 = vpop.f32.mrf.mxu0
      %1959 = vmatprep.mubr.bf16.mxu0 0
      %1960 = vmatmul.mubr.bf16.gmra.mxu0 %v1825
      %v1961 = vpop.f32.mrf.mxu0
      %v1962 = vadd.f32 %v1782, %v1961
      %v1963 = vpop.f32.mrf.mxu0
      %v1964 = vpop.f32.mrf.mxu0
      %v1965 = vadd.f32 %v1782, %v1964
      %v1966 = vpop.f32.mrf.mxu0
      %1967 = vmatprep.mubr.bf16.mxu0 0
      %1968 = vmatmul.mubr.bf16.gmra.mxu0 %v1828
      %v1969 = vpop.f32.mrf.mxu0
      %v1970 = vadd.f32 %v1782, %v1969
      %v1971 = vpop.f32.mrf.mxu0
      %v1972 = vpop.f32.mrf.mxu0
      %v1973 = vadd.f32 %v1782, %v1972
      %v1974 = vpop.f32.mrf.mxu0
      %1975 = vmatprep.mubr.bf16.mxu0 0
      %1976 = vmatmul.mubr.bf16.gmra.mxu0 %v1831
      %v1977 = vpop.f32.mrf.mxu0
      %v1978 = vadd.f32 %v1782, %v1977
      %v1979 = vpop.f32.mrf.mxu0
      %v1980 = vpop.f32.mrf.mxu0
      %v1981 = vadd.f32 %v1782, %v1980
      %v1982 = vpop.f32.mrf.mxu0
      %1983 = vmatprep.mubr.bf16.mxu0 0
      %1984 = vmatmul.mubr.bf16.gmra.mxu0 %v1834
      %v1985 = vpop.f32.mrf.mxu0
      %v1986 = vadd.f32 %v1782, %v1985
      %v1987 = vpop.f32.mrf.mxu0
      %v1988 = vpop.f32.mrf.mxu0
      %v1989 = vadd.f32 %v1782, %v1988
      %v1990 = vpop.f32.mrf.mxu0
      %1991 = vmatprep.mubr.bf16.mxu0 0
      %1992 = vmatmul.mubr.bf16.gmra.mxu0 %v1837
      %v1993 = vpop.f32.mrf.mxu0
      %v1994 = vadd.f32 %v1782, %v1993
      %v1995 = vpop.f32.mrf.mxu0
      %v1996 = vpop.f32.mrf.mxu0
      %v1997 = vadd.f32 %v1782, %v1996
      %v1998 = vpop.f32.mrf.mxu0
      %1999 = vdwg.mxu0
      %vm2000 = vcmask 7168
      %2001 = vst.msk [vmem:[%s358] sm:$0xff] %vm2000, %v1874
      %2002 = vst.msk [vmem:[%s358 + $0x8] sm:$0xff] %vm2000, %v1877
      %2003 = vst.msk [vmem:[%s358 + $0x10] sm:$0xff] %vm2000, %v1882
      %2004 = vst.msk [vmem:[%s358 + $0x18] sm:$0xff] %vm2000, %v1885
      %2005 = vst.msk [vmem:[%s358 + $0x20] sm:$0xff] %vm2000, %v1890
      %2006 = vst.msk [vmem:[%s358 + $0x28] sm:$0xff] %vm2000, %v1893
      %2007 = vst.msk [vmem:[%s358 + $0x30] sm:$0xff] %vm2000, %v1898
      %2008 = vst.msk [vmem:[%s358 + $0x38] sm:$0xff] %vm2000, %v1901
      %2009 = vst.msk [vmem:[%s358 + $0x40] sm:$0xff] %vm2000, %v1906
      %2010 = vst.msk [vmem:[%s358 + $0x48] sm:$0xff] %vm2000, %v1909
      %2011 = vst.msk [vmem:[%s358 + $0x50] sm:$0xff] %vm2000, %v1914
      %2012 = vst.msk [vmem:[%s358 + $0x58] sm:$0xff] %vm2000, %v1917
      %2013 = vst.msk [vmem:[%s358 + $0x60] sm:$0xff] %vm2000, %v1922
      %2014 = vst.msk [vmem:[%s358 + $0x68] sm:$0xff] %vm2000, %v1925
      %2015 = vst.msk [vmem:[%s358 + $0x70] sm:$0xff] %vm2000, %v1930
      %2016 = vst.msk [vmem:[%s358 + $0x78] sm:$0xff] %vm2000, %v1933
      %2017 = vst.msk [vmem:[%s358 + $0x80] sm:$0xff] %vm2000, %v1938
      %2018 = vst.msk [vmem:[%s358 + $0x88] sm:$0xff] %vm2000, %v1941
      %2019 = vst.msk [vmem:[%s358 + $0x90] sm:$0xff] %vm2000, %v1946
      %2020 = vst.msk [vmem:[%s358 + $0x98] sm:$0xff] %vm2000, %v1949
      %2021 = vst.msk [vmem:[%s358 + $0xa0] sm:$0xff] %vm2000, %v1954
      %2022 = vst.msk [vmem:[%s358 + $0xa8] sm:$0xff] %vm2000, %v1957
      %2023 = vst.msk [vmem:[%s358 + $0xb0] sm:$0xff] %vm2000, %v1962
      %2024 = vst.msk [vmem:[%s358 + $0xb8] sm:$0xff] %vm2000, %v1965
      %2025 = vst.msk [vmem:[%s358 + $0xc0] sm:$0xff] %vm2000, %v1970
      %2026 = vst.msk [vmem:[%s358 + $0xc8] sm:$0xff] %vm2000, %v1973
      %2027 = vst.msk [vmem:[%s358 + $0xd0] sm:$0xff] %vm2000, %v1978
      %2028 = vst.msk [vmem:[%s358 + $0xd8] sm:$0xff] %vm2000, %v1981
      %2029 = vst.msk [vmem:[%s358 + $0xe0] sm:$0xff] %vm2000, %v1986
      %2030 = vst.msk [vmem:[%s358 + $0xe8] sm:$0xff] %vm2000, %v1989
      %2031 = vst.msk [vmem:[%s358 + $0xf0] sm:$0xff] %vm2000, %v1994
      %2032 = vst.msk [vmem:[%s358 + $0xf8] sm:$0xff] %vm2000, %v1997
      %s2033 = smul.u32 32, %s22
      %p2034 = scmp.lt.s32.totalorder %s2033, 127
      %s2035 = scalar_select %p2034, %s2033, 127
      %s2036 = smul.addr %s2035, 8
      %s2037 = scalar_lea.vmem %s9, %s2036
      // Predicated region
      $region57: #{tpu_custom_call.1} parent=55 // pred_check
        %p2038 = pneg %p239
      $region58: #{tpu_custom_call.1} parent=55 // pred_check_branch
        %2040 = sbr.rel (%p2038) target = $region60
      $region59: #{tpu_custom_call.1} parent=55 // pred_region
        %s2041 = smul.u32 32, %s22
      $region60: #{tpu_custom_call.1} parent=55 // pred_fallthru
        _
    $region56: #{tpu_custom_call.1} parent=5 // pred_fallthru
      _
    %p2042 = scmp.le.s32.totalorder 2, %s17
    // Predicated region
    $region61: #{tpu_custom_call.1} parent=5 // pred_check
      %p2043 = pneg %p2042
    $region62: #{tpu_custom_call.1} parent=5 // pred_check_branch
      %2045 = sbr.rel (%p2043) target = $region64
    $region63: #{tpu_custom_call.1} parent=5 // pred_region
      %s2046 = ssub.s32 %s17, 2
      // Predicated region
      $region65: #{tpu_custom_call.1} parent=63 // pred_check
        %p2047 = pneg %p245
      $region66: #{tpu_custom_call.1} parent=63 // pred_check_branch
        %2049 = sbr.rel (%p2047) target = $region68
      $region67: #{tpu_custom_call.1} parent=63 // pred_region
        %s2050 = smul.u32 32, %s23
        %p2051 = scmp.lt.s32.totalorder %s2050, 127
        %s2052 = scalar_select %p2051, %s2050, 127
        %s2053 = smul.addr %s2052, 8
        %s2054 = scalar_lea.vmem %s9, %s2053
      $region68: #{tpu_custom_call.1} parent=63 // pred_fallthru
        _
    $region64: #{tpu_custom_call.1} parent=5 // pred_fallthru
      _
  $region6: #{tpu_custom_call.1} parent=0 // loop_footer
    %s21 = sadd.s32 1, %s17
  $region7: #{tpu_custom_call.1} parent=0 // loop_footer_branch
    %16 = sbr.rel target = $region3
  $region8: #{tpu_custom_call.1} parent=0 // loop_exit
    _

</llo_original>
